<compile_context>
chip_gen: v7x
topology: tpu7x:2x2x1
jax: 0.10.0
libtpu: 0.0.40
codegen_flags: <defaults>
</compile_context>

<pallas_src>
import jax
import jax.numpy as jnp
from jax.experimental import pallas as pl
from jax.experimental.pallas import tpu as pltpu


# --------------------------------------------------------------------------- #
# Kernel bodies
# --------------------------------------------------------------------------- #

def _silu_gate(h1, h2):
    """silu(h1) * h2 in f32; reciprocal routed to the EUP (approx)."""
    return (h1 * pl.reciprocal(1.0 + jnp.exp(-h1), approx=True)) * h2


def _ffn_kernel_single(x_ref, w1_ref, w2_ref, w3_ref, o_ref):
    """Whole-H kernel (grid = (M_tiles,)): no reduction phases, no scratch.

    x_ref : (tm, D)  bf16 activation tile
    w1/w2 : (D, H)   full gate weights, (K, N) layout
    w3    : (H, D)   full down-projection, (K, N) layout
    o_ref : (tm, D)
    """
    x = x_ref[...]
    h1 = jnp.dot(x, w1_ref[...], preferred_element_type=jnp.float32)
    h2 = jnp.dot(x, w2_ref[...], preferred_element_type=jnp.float32)
    g = _silu_gate(h1, h2)
    o_ref[...] = jnp.dot(
        g.astype(w3_ref.dtype), w3_ref[...], preferred_element_type=jnp.float32
    ).astype(o_ref.dtype)
    # TODO(synk): dropout prob is 0.0 (identity); nonzero dropout would add an
    # in-kernel mask via pltpu.prng_seed + pltpu.prng_random_bits here.


def _ffn_kernel_multi_f32out(x_ref, w1_ref, w2_ref, w3_ref, o_ref):
    """H-tiled kernel, f32 output: accumulate straight into the resident o_ref."""
    h_step = pl.program_id(1)

    @pl.when(h_step == 0)
    def _():
        o_ref[...] = jnp.zeros_like(o_ref)

    x = x_ref[...]
    h1 = jnp.dot(x, w1_ref[...], preferred_element_type=jnp.float32)
    h2 = jnp.dot(x, w2_ref[...], preferred_element_type=jnp.float32)
    g = _silu_gate(h1, h2)
    o_ref[...] += jnp.dot(
        g.astype(w3_ref.dtype), w3_ref[...], preferred_element_type=jnp.float32)


def _ffn_kernel_multi_acc(x_ref, w1_ref, w2_ref, w3_ref, o_ref, acc_ref):
    """H-tiled kernel, non-f32 output: f32 VMEM accumulator + final cast."""
    h_step = pl.program_id(1)

    @pl.when(h_step == 0)
    def _():
        acc_ref[...] = jnp.zeros_like(acc_ref)

    x = x_ref[...]
    h1 = jnp.dot(x, w1_ref[...], preferred_element_type=jnp.float32)
    h2 = jnp.dot(x, w2_ref[...], preferred_element_type=jnp.float32)
    g = _silu_gate(h1, h2)
    acc_ref[...] += jnp.dot(
        g.astype(w3_ref.dtype), w3_ref[...], preferred_element_type=jnp.float32)

    @pl.when(h_step == pl.num_programs(1) - 1)
    def _():
        o_ref[...] = acc_ref[...].astype(o_ref.dtype)


# --------------------------------------------------------------------------- #
# Wrapper
# --------------------------------------------------------------------------- #

def _choose_tile(total: int, preferred: int, granule: int) -> int:
    """Largest tile <= preferred that divides `total` and is a multiple of
    `granule`; falls back to the full extent (always a legal block dim)."""
    t = min(preferred, total)
    t -= t % granule
    while t >= granule:
        if total % t == 0:
            return t
        t -= granule
    return total


def feed_forward(x, w1, w2, w3, *, tm=None, th=None):
    """SwiGLU FFN.

    x : (B, S, D)
    w1, w2 : (D, H)   c_fc1 / c_fc2 weights, PRE-TRANSPOSED to (in, out)
    w3     : (H, D)   c_proj weight, PRE-TRANSPOSED to (in, out)
    Output dtype matches x.dtype; the matmuls run in the weight dtype (bf16)
    with f32 accumulation.
    """
    B, S, D = x.shape
    D1, H = w1.shape
    assert D1 == D and w2.shape == (D, H) and w3.shape == (H, D)

    M = B * S
    out_dtype = x.dtype
    # One-time wrapper-side cast: kernel DMAs bf16 activations, no per-step cast.
    x2d = x.reshape(M, D).astype(w1.dtype)

    x_bytes = jnp.dtype(x2d.dtype).itemsize
    w_bytes = jnp.dtype(w1.dtype).itemsize
    out_bytes = jnp.dtype(out_dtype).itemsize

    # Generation-aware VMEM budget (~75% of physical capacity).
    try:
        vmem_cap = int(pltpu.get_tpu_info().vmem_capacity_bytes)
    except Exception:
        vmem_cap = 64 << 20  # conservative (v7x per-TC size)
    vmem_budget = int(vmem_cap * 0.75)

    # --- tile selection ----------------------------------------------------
    if tm is None:
        # Bigger default when VMEM is large (v5e/v6e 128 MiB) to amortize
        # weight re-streaming; smaller on v7x (64 MiB).  v5e users can pass
        # tm=256 explicitly (already compute-bound there).
        tm = 768 if vmem_cap >= (100 << 20) else 512
        if M >= 256:
            tm = min(tm, M // 2)      # keep >=2 M tiles for megacore sharding
    tm = _choose_tile(M, tm, 128)     # 128-granular: full MXU M-width on v5e

    if th is None:
        th = 512
    if H < 512:
        th = H                        # collapse the H axis for small hidden dims
    else:
        th = _choose_tile(H, th, 256)  # 256-granular: full N-width on v6e/v7x

    single = (th == H)
    use_out_acc = (not single) and (out_dtype == jnp.float32)
    use_scratch = (not single) and (not use_out_acc)

    def _vmem_need(tm_, th_):
        n = 2 * tm_ * D * x_bytes            # x tiles (double-buffered)
        n += 2 * 2 * D * th_ * w_bytes       # w1 + w2 tiles
        n += 2 * th_ * D * w_bytes           # w3 tiles
        n += 2 * tm_ * D * out_bytes         # output tiles
        n += 3 * tm_ * th_ * 4               # h1 / h2 / gate f32 intermediates
        if use_scratch:
            n += tm_ * D * 4                 # f32 accumulator scratch
        return n

    # Bounded, guarded shrink of tm if the tile set would not fit.
    for _ in range(6):
        if _vmem_need(tm, th) + (8 << 20) <= vmem_budget or tm <= 128:
            break
        new_tm = _choose_tile(M, max(tm // 2, 128), 128)
        if new_tm >= tm:
            break
        tm = new_tm

    vmem_limit = int(min(vmem_budget, max(32 << 20, _vmem_need(tm, th) + (8 << 20))))

    grid_m = pl.cdiv(M, tm)
    # Advisory: count the per-M-tile weight re-streaming in HBM bytes.
    w_hbm_reads = (1 if single else grid_m) * 3 * H * D * w_bytes
    cost = pl.CostEstimate(
        flops=6 * M * D * H,                 # 3 matmuls, 2*M*D*H each
        transcendentals=2 * M * H,           # exp + reciprocal per gate element
        bytes_accessed=M * D * x_bytes + M * D * out_bytes + w_hbm_reads,
    )

    if single:
        grid = (grid_m,)
        in_specs = [
            pl.BlockSpec((tm, D), lambda i: (i, 0)),   # x tile
            pl.BlockSpec((D, H), lambda i: (0, 0)),    # w1 (resident)
            pl.BlockSpec((D, H), lambda i: (0, 0)),    # w2 (resident)
            pl.BlockSpec((H, D), lambda i: (0, 0)),    # w3 (resident)
        ]
        out_specs = pl.BlockSpec((tm, D), lambda i: (i, 0))
        scratch = []
        kernel = _ffn_kernel_single
        dims = ("parallel",)
    else:
        grid = (grid_m, pl.cdiv(H, th))                # reduction axis (H) last
        in_specs = [
            pl.BlockSpec((tm, D), lambda i, h: (i, 0)),  # x: resident across H
            pl.BlockSpec((D, th), lambda i, h: (0, h)),  # w1 tile (streams)
            pl.BlockSpec((D, th), lambda i, h: (0, h)),  # w2 tile (streams)
            pl.BlockSpec((th, D), lambda i, h: (h, 0)),  # w3 tile (streams)
        ]
        out_specs = pl.BlockSpec((tm, D), lambda i, h: (i, 0))
        if use_out_acc:
            kernel = _ffn_kernel_multi_f32out
            scratch = []
        else:
            kernel = _ffn_kernel_multi_acc
            scratch = [pltpu.VMEM((tm, D), jnp.float32)]
        dims = ("parallel", "arbitrary")
        # TODO(synk): if profiling on v7x shows exposed DMA, add
        # pipeline_mode=pl.Buffered(3) on the three weight BlockSpecs.

    out2d = pl.pallas_call(
        kernel,
        out_shape=jax.ShapeDtypeStruct((M, D), out_dtype),
        grid_spec=pltpu.PrefetchScalarGridSpec(
            num_scalar_prefetch=0,
            grid=grid,
            in_specs=in_specs,
            out_specs=out_specs,
            scratch_shapes=scratch,
        ),
        compiler_params=pltpu.CompilerParams(
            dimension_semantics=dims,
            vmem_limit_bytes=vmem_limit,
        ),
        cost_estimate=cost,
    )(x2d, w1, w2, w3)

    return out2d.reshape(B, S, D)


# --------------------------------------------------------------------------- #
# Demo / self-check
# --------------------------------------------------------------------------- #

def _reference(x, w1, w2, w3):
    """Pure-JAX reference with the same bf16-inputs / f32-accum numerics."""
    B, S, D = x.shape
    xb = x.reshape(-1, D).astype(w1.dtype)
    h1 = jnp.dot(xb, w1, preferred_element_type=jnp.float32)
    h2 = jnp.dot(xb, w2, preferred_element_type=jnp.float32)
    g = h1 * jax.nn.sigmoid(h1) * h2
    y = jnp.dot(g.astype(w3.dtype), w3, preferred_element_type=jnp.float32)
    return y.reshape(B, S, -1).astype(x.dtype)


if __name__ == "__main__":
    # ---- Config A: the module's hidden-size math (demo shape) --------------
    embedded_dim = 128
    n_hidden_in = 4 * embedded_dim            # 512
    multiple_of = 128
    # dropout = 0.0 -> identity (inference)

    n_hidden = int(2 * n_hidden_in / 3)                                      # 341
    n_hidden = multiple_of * ((n_hidden + multiple_of - 1) // multiple_of)   # 384

    batch, seq = 2, 256                        # M = 512

    key = jax.random.PRNGKey(0)
    kx, k1, k2, k3 = jax.random.split(key, 4)

    x = jax.random.normal(kx, (batch, seq, embedded_dim), dtype=jnp.float32)

    # nn.Linear weights are (out_features, in_features).  Do the ONE-TIME
    # parameter-load transform here: cast to bf16 and transpose to (K, N).
    w1_oi = jax.random.normal(k1, (n_hidden, embedded_dim), jnp.float32) * 0.05
    w2_oi = jax.random.normal(k2, (n_hidden, embedded_dim), jnp.float32) * 0.05
    w3_oi = jax.random.normal(k3, (embedded_dim, n_hidden), jnp.float32) * 0.05
    w1 = jnp.asarray(w1_oi.T, jnp.bfloat16)    # (D, H)
    w2 = jnp.asarray(w2_oi.T, jnp.bfloat16)    # (D, H)
    w3 = jnp.asarray(w3_oi.T, jnp.bfloat16)    # (H, D)

    out = jax.block_until_ready(feed_forward(x, w1, w2, w3))
    ref = _reference(x, w1, w2, w3)
    assert out.shape == (batch, seq, embedded_dim)
    assert jnp.allclose(out, ref, atol=3e-2, rtol=3e-2), "config A mismatch"

    # ---- Config B: exercise the H-tiled reduction path (f32 output) --------
    H2 = 1024
    kx2, k4, k5, k6 = jax.random.split(jax.random.PRNGKey(1), 4)
    x2 = jax.random.normal(kx2, (2, 64, embedded_dim), dtype=jnp.float32)
    w1b = (jax.random.normal(k4, (embedded_dim, H2), jnp.float32) * 0.05).astype(jnp.bfloat16)
    w2b = (jax.random.normal(k5, (embedded_dim, H2), jnp.float32) * 0.05).astype(jnp.bfloat16)
    w3b = (jax.random.normal(k6, (H2, embedded_dim), jnp.float32) * 0.05).astype(jnp.bfloat16)

    out2 = jax.block_until_ready(feed_forward(x2, w1b, w2b, w3b, th=256))
    ref2 = _reference(x2, w1b, w2b, w3b)
    assert jnp.allclose(out2, ref2, atol=3e-2, rtol=3e-2), "config B mismatch"

    # ---- Config C: H-tiled path with bf16 activations (scratch accumulator)-
    x3 = x2.astype(jnp.bfloat16)
    out3 = jax.block_until_ready(feed_forward(x3, w1b, w2b, w3b, th=256))
    ref3 = _reference(x3, w1b, w2b, w3b)
    assert jnp.allclose(out3.astype(jnp.float32), ref3.astype(jnp.float32),
                        atol=5e-2, rtol=5e-2), "config C mismatch"

    print("KERNEL_OK")
</pallas_src>

<mosaic_0001>
module attributes {stable_mosaic.version = 11 : i64} {
  func.func @_ffn_kernel_single(%arg0: i32, %arg1: memref<256x128xbf16, #tpu.memory_space<vmem>>, %arg2: memref<128x384xbf16, #tpu.memory_space<vmem>>, %arg3: memref<128x384xbf16, #tpu.memory_space<vmem>>, %arg4: memref<384x128xbf16, #tpu.memory_space<vmem>>, %arg5: memref<256x128xf32, #tpu.memory_space<vmem>>) attributes {dimension_semantics = [#tpu.dimension_semantics<parallel>], iteration_bounds = array<i64: 2>, scalar_prefetch = 0 : i64, scratch_operands = 0 : i64, tpu.core_type = #tpu.core_type<tc>, window_params = [{transform_indices = @transform_0, window_bounds = array<i64: 256, 128>}, {pipeline_mode = #tpu.pipeline_mode<synchronous>, transform_indices = @transform_1, window_bounds = array<i64: 128, 384>}, {pipeline_mode = #tpu.pipeline_mode<synchronous>, transform_indices = @transform_2, window_bounds = array<i64: 128, 384>}, {pipeline_mode = #tpu.pipeline_mode<synchronous>, transform_indices = @transform_3, window_bounds = array<i64: 384, 128>}, {transform_indices = @transform_4, window_bounds = array<i64: 256, 128>}]} {
    %c0 = arith.constant 0 : index
    %c0_0 = arith.constant 0 : index
    %0 = vector.load %arg1[%c0, %c0_0] : memref<256x128xbf16, #tpu.memory_space<vmem>>, vector<256x128xbf16>
    %c0_1 = arith.constant 0 : index
    %c0_2 = arith.constant 0 : index
    %1 = vector.load %arg2[%c0_1, %c0_2] : memref<128x384xbf16, #tpu.memory_space<vmem>>, vector<128x384xbf16>
    %cst = arith.constant dense<0.000000e+00> : vector<256x384xf32>
    %2 = tpu.matmul %0, %1, %cst {dimension_numbers = #tpu.dot_dimension_numbers<[1], [0], [0], [1], [0, 0, 1, 1], [], []>} : vector<256x128xbf16>, vector<128x384xbf16>, vector<256x384xf32> -> vector<256x384xf32>
    %c0_3 = arith.constant 0 : index
    %c0_4 = arith.constant 0 : index
    %3 = vector.load %arg3[%c0_3, %c0_4] : memref<128x384xbf16, #tpu.memory_space<vmem>>, vector<128x384xbf16>
    %cst_5 = arith.constant dense<0.000000e+00> : vector<256x384xf32>
    %4 = tpu.matmul %0, %3, %cst_5 {dimension_numbers = #tpu.dot_dimension_numbers<[1], [0], [0], [1], [0, 0, 1, 1], [], []>} : vector<256x128xbf16>, vector<128x384xbf16>, vector<256x384xf32> -> vector<256x384xf32>
    %cst_6 = arith.constant 0.000000e+00 : f32
    %5 = vector.broadcast %cst_6 : f32 to vector<256x384xf32>
    %6 = arith.subf %5, %2 : vector<256x384xf32>
    %7 = math.exp %6 : vector<256x384xf32>
    %cst_7 = arith.constant 1.000000e+00 : f32
    %8 = vector.broadcast %cst_7 : f32 to vector<256x384xf32>
    %9 = arith.addf %8, %7 : vector<256x384xf32>
    %10 = tpu.reciprocal %9 {approx = true} : vector<256x384xf32> -> vector<256x384xf32>
    %11 = arith.mulf %2, %10 : vector<256x384xf32>
    %12 = arith.mulf %11, %4 : vector<256x384xf32>
    %13 = arith.truncf %12 : vector<256x384xf32> to vector<256x384xbf16>
    %c0_8 = arith.constant 0 : index
    %c0_9 = arith.constant 0 : index
    %14 = vector.load %arg4[%c0_8, %c0_9] : memref<384x128xbf16, #tpu.memory_space<vmem>>, vector<384x128xbf16>
    %cst_10 = arith.constant dense<0.000000e+00> : vector<256x128xf32>
    %15 = tpu.matmul %13, %14, %cst_10 {dimension_numbers = #tpu.dot_dimension_numbers<[1], [0], [0], [1], [0, 0, 1, 1], [], []>} : vector<256x384xbf16>, vector<384x128xbf16>, vector<256x128xf32> -> vector<256x128xf32>
    %c0_11 = arith.constant 0 : index
    %c0_12 = arith.constant 0 : index
    %16 = vector.load %arg5[%c0_11, %c0_12] : memref<256x128xf32, #tpu.memory_space<vmem>>, vector<256x128xf32>
    tpu.vector_store %arg5[%c0_11, %c0_12], %15 {strides = array<i32>} : memref<256x128xf32, #tpu.memory_space<vmem>>, vector<256x128xf32>,
    return
  }
  func.func @transform_0(%arg0: i32) -> (i32, i32) {
    %c0_i32 = arith.constant 0 : i32
    %c0_i32_0 = arith.constant 0 : i32
    return %arg0, %c0_i32 : i32, i32
  }
  func.func @transform_1(%arg0: i32) -> (i32, i32) {
    %c0_i32 = arith.constant 0 : i32
    %c0_i32_0 = arith.constant 0 : i32
    %c0_i32_1 = arith.constant 0 : i32
    return %c0_i32, %c0_i32_0 : i32, i32
  }
  func.func @transform_2(%arg0: i32) -> (i32, i32) {
    %c0_i32 = arith.constant 0 : i32
    %c0_i32_0 = arith.constant 0 : i32
    %c0_i32_1 = arith.constant 0 : i32
    return %c0_i32, %c0_i32_0 : i32, i32
  }
  func.func @transform_3(%arg0: i32) -> (i32, i32) {
    %c0_i32 = arith.constant 0 : i32
    %c0_i32_0 = arith.constant 0 : i32
    %c0_i32_1 = arith.constant 0 : i32
    return %c0_i32, %c0_i32_0 : i32, i32
  }
  func.func @transform_4(%arg0: i32) -> (i32, i32) {
    %c0_i32 = arith.constant 0 : i32
    %c0_i32_0 = arith.constant 0 : i32
    return %arg0, %c0_i32 : i32, i32
  }
}

</mosaic_0001>

<llo_original>
// kernel: tpu_custom_call.1
$region0: #{tpu_custom_call.1}
  #allocation0 [shape = 'u32[]', space=smem, size = 0x4, offset = 0x4, fixed_abs, tag = 'smem constant byte address 0x4 - core index']
  #allocation1 [shape = 'u32[144,128]{1,0:T(1,128)}', space=vmem, size = 0x12000, scoped, tag = 'internal scratch']
  %s0 = inlined_call_operand.hbm [shape: bf16[512,128], index: 0, kind: input, shape index: {}]
  %s1 = inlined_call_operand.hbm [shape: bf16[128,384], index: 1, kind: input, shape index: {}]
  %s2 = inlined_call_operand.hbm [shape: bf16[128,384], index: 2, kind: input, shape index: {}]
  %s3 = inlined_call_operand.hbm [shape: bf16[384,128], index: 3, kind: input, shape index: {}]
  %s4 = inlined_call_operand.hbm [shape: f32[512,128], index: 4, kind: output, shape index: {}]
  %s5 = sld [smem:[#allocation0]]
  $region65: #{tpu_custom_call.1} parent=0
    _
  %s7 = ssub.s32 1, %s5
  %s8 = scalar_select 0, %s7, %s5
  $region1: #{tpu_custom_call.1} parent=0
    #allocation2 [shape = 'u8[131072]{0}', space=vmem, size = 0x20000, scoped, tag = 'input window, operand 0']
    #allocation3 [shape = 's32[2]{0}', space=sflag, size = 0x8, scoped, tag = 'scoped memory for tpu_custom_call.1']
    #allocation4 [shape = 's32[2]{0}', space=sflag, size = 0x8, scoped, tag = 'scoped memory for tpu_custom_call.1']
    #allocation5 [shape = 'u8[98304]{0}', space=vmem, size = 0x18000, scoped, tag = 'input window, operand 1, single buffered']
    #allocation6 [shape = 's32[1]{0}', space=sflag, size = 0x4, scoped, tag = 'scoped memory for tpu_custom_call.1']
    #allocation7 [shape = 'u8[98304]{0}', space=vmem, size = 0x18000, scoped, tag = 'input window, operand 2, single buffered']
    #allocation8 [shape = 'u8[98304]{0}', space=vmem, size = 0x18000, scoped, tag = 'input window, operand 3, single buffered']
    #allocation9 [shape = 's32[1]{0}', space=sflag, size = 0x4, scoped, tag = 'scoped memory for tpu_custom_call.1']
    #allocation10 [shape = 'u8[262144]{0}', space=vmem, size = 0x40000, scoped, tag = 'output window, operand 0']
    %9 = vsyncpa [#allocation3], 0
    %s10 = scalar_lea.sflag [#allocation3], 1
    %11 = vsyncpa %s10, 0
    %12 = vsyncpa [#allocation6], 0
    %13 = vsyncpa [#allocation9], 0
    %14 = vsyncpa [#allocation4], 0
    %s15 = scalar_lea.sflag [#allocation4], 1
    %16 = vsyncpa %s15, 0
    loop: start=0, step=1, limit=4
    $region2: #{tpu_custom_call.1} parent=1 // loop_pre_header
      _
    $region3: #{tpu_custom_call.1} parent=1 // loop_header
      %s18 = sphi 0, %s22
      %p19 = scmp.ge.s32.totalorder %s18, 4
      %s28 = sphi 0, %s30
      %s31 = sphi 0, %s28
      %s32 = sphi 0, %s31
      %s48 = sphi 0, %s32
      %s52 = sphi 0, %s52
      %s54 = sphi 0, %s52
      %s55 = sphi 0, %s54
      %s69 = sphi 0, %s55
      %s73 = sphi 0, %s73
      %s75 = sphi 0, %s73
      %s76 = sphi 0, %s75
      %s90 = sphi 0, %s76
      %s94 = sphi 0, %s94
      %s96 = sphi 0, %s94
      %s97 = sphi 0, %s96
      %s111 = sphi 0, %s97
      %s117 = sphi 0, %s119
      %s120 = sphi 0, %s117
      %s121 = sphi 0, %s120
      %s137 = sphi 0, %s121
    $region4: #{tpu_custom_call.1} parent=1 // loop_header_branch
      %21 = sbr.rel (%p19) target = $region8
    $region5: #{tpu_custom_call.1} parent=1 // loop_body
      %s23 = ssub.s32 %s18, 1
      %s24 = ssub.s32 %s18, 2
      %s25 = sadd.s32 %s18, 1
      %s26 = ssub.s32 %s18, %s25
      %p27 = scmp.eq.s32.totalorder %s26, 0
      %s29 = sadd.s32 %s28, 1
      %s30 = scalar_select %p27, %s28, %s29
      %p33 = pneg %p27
      %p34 = scmp.eq.s32.totalorder %s18, 1
      %p35 = por %p33, %p34
      %p36 = scmp.ne.s32.totalorder %s28, %s31
      %p37 = scmp.eq.s32.totalorder %s18, 0
      %p38 = por %p36, %p37
      %p39 = scmp.ne.s32.totalorder %s28, %s31
      %p40 = scmp.eq.s32.totalorder %s23, 1
      %p41 = por %p39, %p40
      %p42 = scmp.ne.s32.totalorder %s31, %s32
      %p43 = scmp.eq.s32.totalorder %s23, 0
      %p44 = por %p42, %p43
      %p45 = scmp.ne.s32.totalorder %s31, %s32
      %p46 = scmp.eq.s32.totalorder %s24, 1
      %p47 = por %p45, %p46
      %p49 = scmp.ne.s32.totalorder %s32, %s48
      %p50 = scmp.eq.s32.totalorder %s24, 0
      %p51 = por %p49, %p50
      %s53 = sadd.s32 %s52, 1
      %p56 = scmp.eq.s32.totalorder %s18, 1
      %p57 = scmp.ne.s32.totalorder %s52, %s54
      %p58 = scmp.eq.s32.totalorder %s18, 0
      %p59 = por %p57, %p58
      %p60 = scmp.ne.s32.totalorder %s52, %s54
      %p61 = scmp.eq.s32.totalorder %s23, 1
      %p62 = por %p60, %p61
      %p63 = scmp.ne.s32.totalorder %s54, %s55
      %p64 = scmp.eq.s32.totalorder %s23, 0
      %p65 = por %p63, %p64
      %p66 = scmp.ne.s32.totalorder %s54, %s55
      %p67 = scmp.eq.s32.totalorder %s24, 1
      %p68 = por %p66, %p67
      %p70 = scmp.ne.s32.totalorder %s55, %s69
      %p71 = scmp.eq.s32.totalorder %s24, 0
      %p72 = por %p70, %p71
      %s74 = sadd.s32 %s73, 1
      %p77 = scmp.eq.s32.totalorder %s18, 1
      %p78 = scmp.ne.s32.totalorder %s73, %s75
      %p79 = scmp.eq.s32.totalorder %s18, 0
      %p80 = por %p78, %p79
      %p81 = scmp.ne.s32.totalorder %s73, %s75
      %p82 = scmp.eq.s32.totalorder %s23, 1
      %p83 = por %p81, %p82
      %p84 = scmp.ne.s32.totalorder %s75, %s76
      %p85 = scmp.eq.s32.totalorder %s23, 0
      %p86 = por %p84, %p85
      %p87 = scmp.ne.s32.totalorder %s75, %s76
      %p88 = scmp.eq.s32.totalorder %s24, 1
      %p89 = por %p87, %p88
      %p91 = scmp.ne.s32.totalorder %s76, %s90
      %p92 = scmp.eq.s32.totalorder %s24, 0
      %p93 = por %p91, %p92
      %s95 = sadd.s32 %s94, 1
      %p98 = scmp.eq.s32.totalorder %s18, 1
      %p99 = scmp.ne.s32.totalorder %s94, %s96
      %p100 = scmp.eq.s32.totalorder %s18, 0
      %p101 = por %p99, %p100
      %p102 = scmp.ne.s32.totalorder %s94, %s96
      %p103 = scmp.eq.s32.totalorder %s23, 1
      %p104 = por %p102, %p103
      %p105 = scmp.ne.s32.totalorder %s96, %s97
      %p106 = scmp.eq.s32.totalorder %s23, 0
      %p107 = por %p105, %p106
      %p108 = scmp.ne.s32.totalorder %s96, %s97
      %p109 = scmp.eq.s32.totalorder %s24, 1
      %p110 = por %p108, %p109
      %p112 = scmp.ne.s32.totalorder %s97, %s111
      %p113 = scmp.eq.s32.totalorder %s24, 0
      %p114 = por %p112, %p113
      %s115 = ssub.s32 %s18, %s25
      %p116 = scmp.eq.s32.totalorder %s115, 0
      %s118 = sadd.s32 %s117, 1
      %s119 = scalar_select %p116, %s117, %s118
      %p122 = pneg %p116
      %p123 = scmp.eq.s32.totalorder %s18, 1
      %p124 = por %p122, %p123
      %p125 = scmp.ne.s32.totalorder %s117, %s120
      %p126 = scmp.eq.s32.totalorder %s18, 0
      %p127 = por %p125, %p126
      %p128 = scmp.ne.s32.totalorder %s117, %s120
      %p129 = scmp.eq.s32.totalorder %s23, 1
      %p130 = por %p128, %p129
      %p131 = scmp.ne.s32.totalorder %s120, %s121
      %p132 = scmp.eq.s32.totalorder %s23, 0
      %p133 = por %p131, %p132
      %p134 = scmp.ne.s32.totalorder %s120, %s121
      %p135 = scmp.eq.s32.totalorder %s24, 1
      %p136 = por %p134, %p135
      %p138 = scmp.ne.s32.totalorder %s121, %s137
      %p139 = scmp.eq.s32.totalorder %s24, 0
      %p140 = por %p138, %p139
      %p141 = scmp.le.s32.totalorder 1, %s18
      %p142 = scmp.lt.s32.totalorder %s18, 3
      %p143 = pnand %p141, %p142
      %p144 = pneg %p143
      // Predicated region
      $region9: #{tpu_custom_call.1} parent=5 // pred_check
        _
      $region10: #{tpu_custom_call.1} parent=5 // pred_check_branch
        %146 = sbr.rel (%p143) target = $region12
      $region11: #{tpu_custom_call.1} parent=5 // pred_region
        %s147 = ssub.s32 %s18, 1
        // Predicated region
        $region13: #{tpu_custom_call.1} parent=11 // pred_check
          %p148 = pneg %p65
        $region14: #{tpu_custom_call.1} parent=11 // pred_check_branch
          %150 = sbr.rel (%p148) target = $region16
        $region15: #{tpu_custom_call.1} parent=11 // pred_region
          %s152 = ssub.s32 3072, 3072
          %153 = vsyncadd [#allocation6], %s152
          %s154 = sshll.u32 [#allocation5], 4
          %s155 = int_to_ptr.vmem [resolvable:$true] %s154
          %160 = dma.hbm_to_vmem [thread:$0]  %s1, 3072, %s155, [#allocation6], 192, 192, 12
        $region16: #{tpu_custom_call.1} parent=11 // pred_fallthru
          _
        // Predicated region
        $region17: #{tpu_custom_call.1} parent=11 // pred_check
          %p161 = pneg %p86
        $region18: #{tpu_custom_call.1} parent=11 // pred_check_branch
          %163 = sbr.rel (%p161) target = $region20
        $region19: #{tpu_custom_call.1} parent=11 // pred_region
          %s165 = ssub.s32 3072, 3072
          %166 = vsyncadd [#allocation6], %s165
          %s167 = sshll.u32 [#allocation7], 4
          %s168 = int_to_ptr.vmem [resolvable:$true] %s167
          %173 = dma.hbm_to_vmem [thread:$0]  %s2, 3072, %s168, [#allocation6], 192, 192, 12
        $region20: #{tpu_custom_call.1} parent=11 // pred_fallthru
          _
        // Predicated region
        $region21: #{tpu_custom_call.1} parent=11 // pred_check
          %p174 = pneg %p107
        $region22: #{tpu_custom_call.1} parent=11 // pred_check_branch
          %176 = sbr.rel (%p174) target = $region24
        $region23: #{tpu_custom_call.1} parent=11 // pred_region
          %s178 = ssub.s32 3072, 3072
          %179 = vsyncadd [#allocation9], %s178
          %s180 = sshll.u32 [#allocation8], 4
          %s181 = int_to_ptr.vmem [resolvable:$true] %s180
          %186 = dma.hbm_to_vmem [thread:$0]  %s3, 3072, %s181, [#allocation9], 64, 64, 4
        $region24: #{tpu_custom_call.1} parent=11 // pred_fallthru
          _
      $region12: #{tpu_custom_call.1} parent=5 // pred_fallthru
        _
      %p187 = scmp.lt.s32.totalorder %s18, 2
      // Predicated region
      $region25: #{tpu_custom_call.1} parent=5 // pred_check
        %p188 = pneg %p187
      $region26: #{tpu_custom_call.1} parent=5 // pred_check_branch
        %190 = sbr.rel (%p188) target = $region28
      $region27: #{tpu_custom_call.1} parent=5 // pred_region
        // Predicated region
        $region29: #{tpu_custom_call.1} parent=27 // pred_check
          %p191 = pneg %p38
        $region30: #{tpu_custom_call.1} parent=27 // pred_check_branch
          %193 = sbr.rel (%p191) target = $region32
        $region31: #{tpu_custom_call.1} parent=27 // pred_region
          %s194 = sand.u32 %s28, 1
          %s195 = scalar_lea.sflag [#allocation3], %s194
          %s196 = sand.u32 %s28, 1
          %s197 = smul.addr %s196, 128
          %s198 = scalar_lea.vmem [#allocation2], %s197
          %s199 = smul.u32 32, %s18
          %s201 = ssub.s32 2048, 2048
          %202 = vsyncadd %s195, %s201
          %s203 = smul.addr %s199, 64
          %s204 = scalar_lea.hbm %s0, %s203
          %s205 = sshll.u32 %s198, 4
          %s206 = int_to_ptr.vmem [resolvable:$true] %s205
          %211 = dma.hbm_to_vmem [thread:$0]  %s204, 2048, %s206, %s195, 64, 64, 4
        $region32: #{tpu_custom_call.1} parent=27 // pred_fallthru
          _
      $region28: #{tpu_custom_call.1} parent=5 // pred_fallthru
        _
      %p212 = scmp.le.s32.totalorder 1, %s18
      %p213 = scmp.lt.s32.totalorder %s18, 3
      %p214 = pnand %p212, %p213
      %p215 = pneg %p214
      // Predicated region
      $region33: #{tpu_custom_call.1} parent=5 // pred_check
        _
      $region34: #{tpu_custom_call.1} parent=5 // pred_check_branch
        %217 = sbr.rel (%p214) target = $region36
      $region35: #{tpu_custom_call.1} parent=5 // pred_region
        %s218 = ssub.s32 %s18, 1
        %s219 = sand.u32 %s31, 1
        %s220 = scalar_lea.sflag [#allocation3], %s219
        %s221 = sand.u32 %s31, 1
        %s222 = smul.addr %s221, 128
        %s223 = scalar_lea.vmem [#allocation2], %s222
        // Predicated region
        $region37: #{tpu_custom_call.1} parent=35 // pred_check
          %p224 = pneg %p44
        $region38: #{tpu_custom_call.1} parent=35 // pred_check_branch
          %226 = sbr.rel (%p224) target = $region40
        $region39: #{tpu_custom_call.1} parent=35 // pred_region
          %227 = dma.done %s220, 2048
        $region40: #{tpu_custom_call.1} parent=35 // pred_fallthru
          _
        // Predicated region
        $region41: #{tpu_custom_call.1} parent=35 // pred_check
          %p228 = pneg %p65
        $region42: #{tpu_custom_call.1} parent=35 // pred_check_branch
          %230 = sbr.rel (%p228) target = $region44
        $region43: #{tpu_custom_call.1} parent=35 // pred_region
          %231 = dma.done [#allocation6], 3072
        $region44: #{tpu_custom_call.1} parent=35 // pred_fallthru
          _
        // Predicated region
        $region45: #{tpu_custom_call.1} parent=35 // pred_check
          %p232 = pneg %p86
        $region46: #{tpu_custom_call.1} parent=35 // pred_check_branch
          %234 = sbr.rel (%p232) target = $region48
        $region47: #{tpu_custom_call.1} parent=35 // pred_region
          %235 = dma.done [#allocation6], 3072
        $region48: #{tpu_custom_call.1} parent=35 // pred_fallthru
          _
        // Predicated region
        $region49: #{tpu_custom_call.1} parent=35 // pred_check
          %p236 = pneg %p107
        $region50: #{tpu_custom_call.1} parent=35 // pred_check_branch
          %238 = sbr.rel (%p236) target = $region52
        $region51: #{tpu_custom_call.1} parent=35 // pred_region
          %239 = dma.done [#allocation9], 3072
        $region52: #{tpu_custom_call.1} parent=35 // pred_fallthru
          _
        %s240 = sand.u32 %s31, 1
        %s241 = scalar_lea.sflag [#allocation3], %s240
        %s242 = sand.u32 %s31, 1
        %s243 = smul.addr %s242, 128
        %s244 = scalar_lea.vmem [#allocation2], %s243
        %p245 = pneg %p44
        %p246 = pneg %p41
        %p247 = pneg %p65
        %p248 = pneg %p62
        %p249 = pneg %p86
        %p250 = pneg %p83
        %p251 = pneg %p107
        %p252 = pneg %p104
        %p253 = pneg %p133
        %p254 = pneg %p130
        %s255 = sand.u32 %s120, 1
        %s256 = scalar_lea.sflag [#allocation4], %s255
        %s257 = sand.u32 %s120, 1
        %s258 = smul.addr %s257, 256
        %s259 = scalar_lea.vmem [#allocation10], %s258
        %s260 = smul.u32 32, %s23
        %s261 = smul.u32 32, %s23
        %v263 = vld [vmem:[%s223] sm:$0xf]
        %v264 = vld [vmem:[%s223 + $0x4] sm:$0xf]
        %v265 = vld [vmem:[%s223 + $0x8] sm:$0xf]
        %v266 = vld [vmem:[%s223 + $0xc] sm:$0xf]
        %v267 = vld [vmem:[%s223 + $0x10] sm:$0xf]
        %v268 = vld [vmem:[%s223 + $0x14] sm:$0xf]
        %v269 = vld [vmem:[%s223 + $0x18] sm:$0xf]
        %v270 = vld [vmem:[%s223 + $0x1c] sm:$0xf]
        %v271 = vld [vmem:[%s223 + $0x20] sm:$0xf]
        %v272 = vld [vmem:[%s223 + $0x24] sm:$0xf]
        %v273 = vld [vmem:[%s223 + $0x28] sm:$0xf]
        %v274 = vld [vmem:[%s223 + $0x2c] sm:$0xf]
        %v275 = vld [vmem:[%s223 + $0x30] sm:$0xf]
        %v276 = vld [vmem:[%s223 + $0x34] sm:$0xf]
        %v277 = vld [vmem:[%s223 + $0x38] sm:$0xf]
        %v278 = vld [vmem:[%s223 + $0x3c] sm:$0xf]
        %v279 = vld [vmem:[%s223 + $0x40] sm:$0xf]
        %v280 = vld [vmem:[%s223 + $0x44] sm:$0xf]
        %v281 = vld [vmem:[%s223 + $0x48] sm:$0xf]
        %v282 = vld [vmem:[%s223 + $0x4c] sm:$0xf]
        %v283 = vld [vmem:[%s223 + $0x50] sm:$0xf]
        %v284 = vld [vmem:[%s223 + $0x54] sm:$0xf]
        %v285 = vld [vmem:[%s223 + $0x58] sm:$0xf]
        %v286 = vld [vmem:[%s223 + $0x5c] sm:$0xf]
        %v287 = vld [vmem:[%s223 + $0x60] sm:$0xf]
        %v288 = vld [vmem:[%s223 + $0x64] sm:$0xf]
        %v289 = vld [vmem:[%s223 + $0x68] sm:$0xf]
        %v290 = vld [vmem:[%s223 + $0x6c] sm:$0xf]
        %v291 = vld [vmem:[%s223 + $0x70] sm:$0xf]
        %v292 = vld [vmem:[%s223 + $0x74] sm:$0xf]
        %v293 = vld [vmem:[%s223 + $0x78] sm:$0xf]
        %v294 = vld [vmem:[%s223 + $0x7c] sm:$0xf]
        %v295 = vld [vmem:[#allocation5] sm:$0xff]
        %v296 = vld [vmem:[#allocation5 + $0x8] sm:$0xf]
        %v297 = vld [vmem:[#allocation5 + $0xc] sm:$0xff]
        %v298 = vld [vmem:[#allocation5 + $0x14] sm:$0xf]
        %v299 = vld [vmem:[#allocation5 + $0x18] sm:$0xff]
        %v300 = vld [vmem:[#allocation5 + $0x20] sm:$0xf]
        %v301 = vld [vmem:[#allocation5 + $0x24] sm:$0xff]
        %v302 = vld [vmem:[#allocation5 + $0x2c] sm:$0xf]
        %v303 = vld [vmem:[#allocation5 + $0x30] sm:$0xff]
        %v304 = vld [vmem:[#allocation5 + $0x38] sm:$0xf]
        %v305 = vld [vmem:[#allocation5 + $0x3c] sm:$0xff]
        %v306 = vld [vmem:[#allocation5 + $0x44] sm:$0xf]
        %v307 = vld [vmem:[#allocation5 + $0x48] sm:$0xff]
        %v308 = vld [vmem:[#allocation5 + $0x50] sm:$0xf]
        %v309 = vld [vmem:[#allocation5 + $0x54] sm:$0xff]
        %v310 = vld [vmem:[#allocation5 + $0x5c] sm:$0xf]
        %v311 = vld [vmem:[#allocation5 + $0x60] sm:$0xff]
        %v312 = vld [vmem:[#allocation5 + $0x68] sm:$0xf]
        %v313 = vld [vmem:[#allocation5 + $0x6c] sm:$0xff]
        %v314 = vld [vmem:[#allocation5 + $0x74] sm:$0xf]
        %v315 = vld [vmem:[#allocation5 + $0x78] sm:$0xff]
        %v316 = vld [vmem:[#allocation5 + $0x80] sm:$0xf]
        %v317 = vld [vmem:[#allocation5 + $0x84] sm:$0xff]
        %v318 = vld [vmem:[#allocation5 + $0x8c] sm:$0xf]
        %v319 = vld [vmem:[#allocation5 + $0x90] sm:$0xff]
        %v320 = vld [vmem:[#allocation5 + $0x98] sm:$0xf]
        %v321 = vld [vmem:[#allocation5 + $0x9c] sm:$0xff]
        %v322 = vld [vmem:[#allocation5 + $0xa4] sm:$0xf]
        %v323 = vld [vmem:[#allocation5 + $0xa8] sm:$0xff]
        %v324 = vld [vmem:[#allocation5 + $0xb0] sm:$0xf]
        %v325 = vld [vmem:[#allocation5 + $0xb4] sm:$0xff]
        %v326 = vld [vmem:[#allocation5 + $0xbc] sm:$0xf]
        %v359 = vunpack.c.l.b16 %v263
        %v360 = vunpack.c.l.b16 %v264
        %v361 = vunpack.c.l.b16 %v265
        %v362 = vunpack.c.l.b16 %v266
        %v363 = vunpack.c.l.b16 %v267
        %v364 = vunpack.c.l.b16 %v268
        %v365 = vunpack.c.l.b16 %v269
        %v366 = vunpack.c.l.b16 %v270
        %v367 = vunpack.c.l.b16 %v271
        %v368 = vunpack.c.l.b16 %v272
        %v369 = vunpack.c.l.b16 %v273
        %v370 = vunpack.c.l.b16 %v274
        %v371 = vunpack.c.l.b16 %v275
        %v372 = vunpack.c.l.b16 %v276
        %v373 = vunpack.c.l.b16 %v277
        %v374 = vunpack.c.l.b16 %v278
        %v375 = vunpack.c.l.b16 %v279
        %v376 = vunpack.c.l.b16 %v280
        %v377 = vunpack.c.l.b16 %v281
        %v378 = vunpack.c.l.b16 %v282
        %v379 = vunpack.c.l.b16 %v283
        %v380 = vunpack.c.l.b16 %v284
        %v381 = vunpack.c.l.b16 %v285
        %v382 = vunpack.c.l.b16 %v286
        %v383 = vunpack.c.l.b16 %v287
        %v384 = vunpack.c.l.b16 %v288
        %v385 = vunpack.c.l.b16 %v289
        %v386 = vunpack.c.l.b16 %v290
        %v387 = vunpack.c.l.b16 %v291
        %v388 = vunpack.c.l.b16 %v292
        %v389 = vunpack.c.l.b16 %v293
        %v390 = vunpack.c.l.b16 %v294
        %v391 = vpack.c.b16 %v360, %v359
        %v392 = vpack.c.b16 %v362, %v361
        %v393 = vpack.c.b16 %v364, %v363
        %v394 = vpack.c.b16 %v366, %v365
        %v395 = vpack.c.b16 %v368, %v367
        %v396 = vpack.c.b16 %v370, %v369
        %v397 = vpack.c.b16 %v372, %v371
        %v398 = vpack.c.b16 %v374, %v373
        %v399 = vpack.c.b16 %v376, %v375
        %v400 = vpack.c.b16 %v378, %v377
        %v401 = vpack.c.b16 %v380, %v379
        %v402 = vpack.c.b16 %v382, %v381
        %v403 = vpack.c.b16 %v384, %v383
        %v404 = vpack.c.b16 %v386, %v385
        %v405 = vpack.c.b16 %v388, %v387
        %v406 = vpack.c.b16 %v390, %v389
        %v455 = vunpack.c.l.b16 %v295
        %v456 = vunpack.c.h.b16 %v295
        %v457 = vunpack.c.l.b16 %v296
        %v458 = vunpack.c.l.b16 %v297
        %v459 = vunpack.c.h.b16 %v297
        %v460 = vunpack.c.l.b16 %v298
        %v461 = vunpack.c.l.b16 %v299
        %v462 = vunpack.c.h.b16 %v299
        %v463 = vunpack.c.l.b16 %v300
        %v464 = vunpack.c.l.b16 %v301
        %v465 = vunpack.c.h.b16 %v301
        %v466 = vunpack.c.l.b16 %v302
        %v467 = vunpack.c.l.b16 %v303
        %v468 = vunpack.c.h.b16 %v303
        %v469 = vunpack.c.l.b16 %v304
        %v470 = vunpack.c.l.b16 %v305
        %v471 = vunpack.c.h.b16 %v305
        %v472 = vunpack.c.l.b16 %v306
        %v473 = vunpack.c.l.b16 %v307
        %v474 = vunpack.c.h.b16 %v307
        %v475 = vunpack.c.l.b16 %v308
        %v476 = vunpack.c.l.b16 %v309
        %v477 = vunpack.c.h.b16 %v309
        %v478 = vunpack.c.l.b16 %v310
        %v479 = vunpack.c.l.b16 %v311
        %v480 = vunpack.c.h.b16 %v311
        %v481 = vunpack.c.l.b16 %v312
        %v482 = vunpack.c.l.b16 %v313
        %v483 = vunpack.c.h.b16 %v313
        %v484 = vunpack.c.l.b16 %v314
        %v485 = vunpack.c.l.b16 %v315
        %v486 = vunpack.c.h.b16 %v315
        %v487 = vunpack.c.l.b16 %v316
        %v488 = vunpack.c.l.b16 %v317
        %v489 = vunpack.c.h.b16 %v317
        %v490 = vunpack.c.l.b16 %v318
        %v491 = vunpack.c.l.b16 %v319
        %v492 = vunpack.c.h.b16 %v319
        %v493 = vunpack.c.l.b16 %v320
        %v494 = vunpack.c.l.b16 %v321
        %v495 = vunpack.c.h.b16 %v321
        %v496 = vunpack.c.l.b16 %v322
        %v497 = vunpack.c.l.b16 %v323
        %v498 = vunpack.c.h.b16 %v323
        %v499 = vunpack.c.l.b16 %v324
        %v500 = vunpack.c.l.b16 %v325
        %v501 = vunpack.c.h.b16 %v325
        %v502 = vunpack.c.l.b16 %v326
        %v503 = vpack.c.b16 %v458, %v455
        %v504 = vpack.c.b16 %v459, %v456
        %v505 = vpack.c.b16 %v460, %v457
        %v506 = vpack.c.b16 %v464, %v461
        %v507 = vpack.c.b16 %v465, %v462
        %v508 = vpack.c.b16 %v466, %v463
        %v509 = vpack.c.b16 %v470, %v467
        %v510 = vpack.c.b16 %v471, %v468
        %v511 = vpack.c.b16 %v472, %v469
        %v512 = vpack.c.b16 %v476, %v473
        %v513 = vpack.c.b16 %v477, %v474
        %v514 = vpack.c.b16 %v478, %v475
        %v515 = vpack.c.b16 %v482, %v479
        %v516 = vpack.c.b16 %v483, %v480
        %v517 = vpack.c.b16 %v484, %v481
        %v518 = vpack.c.b16 %v488, %v485
        %v519 = vpack.c.b16 %v489, %v486
        %v520 = vpack.c.b16 %v490, %v487
        %v521 = vpack.c.b16 %v494, %v491
        %v522 = vpack.c.b16 %v495, %v492
        %v523 = vpack.c.b16 %v496, %v493
        %v524 = vpack.c.b16 %v500, %v497
        %v525 = vpack.c.b16 %v501, %v498
        %v526 = vpack.c.b16 %v502, %v499
        %551 = vmatprep.subr.bf16.mxu0 %v504
        %552 = vmatpush1.bf16.msra.mxu0 %v503
        %553 = vmatprep.subr.bf16.mxu0 %v507
        %554 = vmatpush1.bf16.msra.mxu0 %v506
        %555 = vmatprep.subr.bf16.mxu0 %v510
        %556 = vmatpush1.bf16.msra.mxu0 %v509
        %557 = vmatprep.subr.bf16.mxu0 %v513
        %558 = vmatpush1.bf16.msra.mxu0 %v512
        %559 = vmatprep.subr.bf16.mxu0 %v516
        %560 = vmatpush1.bf16.msra.mxu0 %v515
        %561 = vmatprep.subr.bf16.mxu0 %v519
        %562 = vmatpush1.bf16.msra.mxu0 %v518
        %563 = vmatprep.subr.bf16.mxu0 %v522
        %564 = vmatpush1.bf16.msra.mxu0 %v521
        %565 = vmatprep.subr.bf16.mxu0 %v525
        %566 = vmatpush1.bf16.msra.mxu0 %v524
        %567 = vmatprep.subr.bf16.mxu0 0
        %568 = vmatpush1.bf16.msra.mxu0 0
        %569 = vmatprep.subr.bf16.mxu0 0
        %570 = vmatpush1.bf16.msra.mxu0 0
        %571 = vmatprep.subr.bf16.mxu0 0
        %572 = vmatpush1.bf16.msra.mxu0 0
        %573 = vmatprep.subr.bf16.mxu0 0
        %574 = vmatpush1.bf16.msra.mxu0 0
        %575 = vmatprep.subr.bf16.mxu0 0
        %576 = vmatpush1.bf16.msra.mxu0 0
        %577 = vmatprep.subr.bf16.mxu0 0
        %578 = vmatpush1.bf16.msra.mxu0 0
        %579 = vmatprep.subr.bf16.mxu0 0
        %580 = vmatpush1.bf16.msra.mxu0 0
        %581 = vmatprep.subr.bf16.mxu0 0
        %582 = vmatpush1.bf16.msra.mxu0 0
        %583 = vmatprep.mubr.bf16.mxu0 0
        %584 = vmatmul.mubr.bf16.gmra.mrb[0].mxu0 %v391
        %v585 = vpop.f32.mrb[0].mxu0
        %v586 = vadd.f32 0.0, %v585
        %v587 = vpop.f32.mrb[0].mxu0
        %v588 = vadd.f32 0.0, %v587
        %v589 = vpop.f32.mrb[0].mxu0
        %v590 = vadd.f32 0.0, %v589
        %v591 = vpop.f32.mrb[0].mxu0
        %v592 = vadd.f32 0.0, %v591
        %593 = vmatprep.mubr.bf16.mxu0 0
        %594 = vmatmul.mubr.bf16.gmra.mrb[0].mxu0 %v392
        %v595 = vpop.f32.mrb[0].mxu0
        %v596 = vadd.f32 0.0, %v595
        %v597 = vpop.f32.mrb[0].mxu0
        %v598 = vadd.f32 0.0, %v597
        %v599 = vpop.f32.mrb[0].mxu0
        %v600 = vadd.f32 0.0, %v599
        %v601 = vpop.f32.mrb[0].mxu0
        %v602 = vadd.f32 0.0, %v601
        %603 = vmatprep.mubr.bf16.mxu0 0
        %604 = vmatmul.mubr.bf16.gmra.mrb[0].mxu0 %v393
        %v605 = vpop.f32.mrb[0].mxu0
        %v606 = vadd.f32 0.0, %v605
        %v607 = vpop.f32.mrb[0].mxu0
        %v608 = vadd.f32 0.0, %v607
        %v609 = vpop.f32.mrb[0].mxu0
        %v610 = vadd.f32 0.0, %v609
        %v611 = vpop.f32.mrb[0].mxu0
        %v612 = vadd.f32 0.0, %v611
        %613 = vmatprep.mubr.bf16.mxu0 0
        %614 = vmatmul.mubr.bf16.gmra.mrb[0].mxu0 %v394
        %v615 = vpop.f32.mrb[0].mxu0
        %v616 = vadd.f32 0.0, %v615
        %v617 = vpop.f32.mrb[0].mxu0
        %v618 = vadd.f32 0.0, %v617
        %v619 = vpop.f32.mrb[0].mxu0
        %v620 = vadd.f32 0.0, %v619
        %v621 = vpop.f32.mrb[0].mxu0
        %v622 = vadd.f32 0.0, %v621
        %623 = vmatprep.mubr.bf16.mxu0 0
        %624 = vmatmul.mubr.bf16.gmra.mrb[0].mxu0 %v395
        %v625 = vpop.f32.mrb[0].mxu0
        %v626 = vadd.f32 0.0, %v625
        %v627 = vpop.f32.mrb[0].mxu0
        %v628 = vadd.f32 0.0, %v627
        %v629 = vpop.f32.mrb[0].mxu0
        %v630 = vadd.f32 0.0, %v629
        %v631 = vpop.f32.mrb[0].mxu0
        %v632 = vadd.f32 0.0, %v631
        %633 = vmatprep.mubr.bf16.mxu0 0
        %634 = vmatmul.mubr.bf16.gmra.mrb[0].mxu0 %v396
        %v635 = vpop.f32.mrb[0].mxu0
        %v636 = vadd.f32 0.0, %v635
        %v637 = vpop.f32.mrb[0].mxu0
        %v638 = vadd.f32 0.0, %v637
        %v639 = vpop.f32.mrb[0].mxu0
        %v640 = vadd.f32 0.0, %v639
        %v641 = vpop.f32.mrb[0].mxu0
        %v642 = vadd.f32 0.0, %v641
        %643 = vmatprep.mubr.bf16.mxu0 0
        %644 = vmatmul.mubr.bf16.gmra.mrb[0].mxu0 %v397
        %v645 = vpop.f32.mrb[0].mxu0
        %v646 = vadd.f32 0.0, %v645
        %v647 = vpop.f32.mrb[0].mxu0
        %v648 = vadd.f32 0.0, %v647
        %v649 = vpop.f32.mrb[0].mxu0
        %v650 = vadd.f32 0.0, %v649
        %v651 = vpop.f32.mrb[0].mxu0
        %v652 = vadd.f32 0.0, %v651
        %653 = vmatprep.mubr.bf16.mxu0 0
        %654 = vmatmul.mubr.bf16.gmra.mrb[0].mxu0 %v398
        %v655 = vpop.f32.mrb[0].mxu0
        %v656 = vadd.f32 0.0, %v655
        %v657 = vpop.f32.mrb[0].mxu0
        %v658 = vadd.f32 0.0, %v657
        %v659 = vpop.f32.mrb[0].mxu0
        %v660 = vadd.f32 0.0, %v659
        %v661 = vpop.f32.mrb[0].mxu0
        %v662 = vadd.f32 0.0, %v661
        %663 = vmatprep.mubr.bf16.mxu0 0
        %664 = vmatmul.mubr.bf16.gmra.mrb[0].mxu0 %v399
        %v665 = vpop.f32.mrb[0].mxu0
        %v666 = vadd.f32 0.0, %v665
        %v667 = vpop.f32.mrb[0].mxu0
        %v668 = vadd.f32 0.0, %v667
        %v669 = vpop.f32.mrb[0].mxu0
        %v670 = vadd.f32 0.0, %v669
        %v671 = vpop.f32.mrb[0].mxu0
        %v672 = vadd.f32 0.0, %v671
        %673 = vmatprep.mubr.bf16.mxu0 0
        %674 = vmatmul.mubr.bf16.gmra.mrb[0].mxu0 %v400
        %v675 = vpop.f32.mrb[0].mxu0
        %v676 = vadd.f32 0.0, %v675
        %v677 = vpop.f32.mrb[0].mxu0
        %v678 = vadd.f32 0.0, %v677
        %v679 = vpop.f32.mrb[0].mxu0
        %v680 = vadd.f32 0.0, %v679
        %v681 = vpop.f32.mrb[0].mxu0
        %v682 = vadd.f32 0.0, %v681
        %683 = vmatprep.mubr.bf16.mxu0 0
        %684 = vmatmul.mubr.bf16.gmra.mrb[0].mxu0 %v401
        %v685 = vpop.f32.mrb[0].mxu0
        %v686 = vadd.f32 0.0, %v685
        %v687 = vpop.f32.mrb[0].mxu0
        %v688 = vadd.f32 0.0, %v687
        %v689 = vpop.f32.mrb[0].mxu0
        %v690 = vadd.f32 0.0, %v689
        %v691 = vpop.f32.mrb[0].mxu0
        %v692 = vadd.f32 0.0, %v691
        %693 = vmatprep.mubr.bf16.mxu0 0
        %694 = vmatmul.mubr.bf16.gmra.mrb[0].mxu0 %v402
        %v695 = vpop.f32.mrb[0].mxu0
        %v696 = vadd.f32 0.0, %v695
        %v697 = vpop.f32.mrb[0].mxu0
        %v698 = vadd.f32 0.0, %v697
        %v699 = vpop.f32.mrb[0].mxu0
        %v700 = vadd.f32 0.0, %v699
        %v701 = vpop.f32.mrb[0].mxu0
        %v702 = vadd.f32 0.0, %v701
        %703 = vmatprep.mubr.bf16.mxu0 0
        %704 = vmatmul.mubr.bf16.gmra.mrb[0].mxu0 %v403
        %v705 = vpop.f32.mrb[0].mxu0
        %v706 = vadd.f32 0.0, %v705
        %v707 = vpop.f32.mrb[0].mxu0
        %v708 = vadd.f32 0.0, %v707
        %v709 = vpop.f32.mrb[0].mxu0
        %v710 = vadd.f32 0.0, %v709
        %v711 = vpop.f32.mrb[0].mxu0
        %v712 = vadd.f32 0.0, %v711
        %713 = vmatprep.mubr.bf16.mxu0 0
        %714 = vmatmul.mubr.bf16.gmra.mrb[0].mxu0 %v404
        %v715 = vpop.f32.mrb[0].mxu0
        %v716 = vadd.f32 0.0, %v715
        %v717 = vpop.f32.mrb[0].mxu0
        %v718 = vadd.f32 0.0, %v717
        %v719 = vpop.f32.mrb[0].mxu0
        %v720 = vadd.f32 0.0, %v719
        %v721 = vpop.f32.mrb[0].mxu0
        %v722 = vadd.f32 0.0, %v721
        %723 = vmatprep.mubr.bf16.mxu0 0
        %724 = vmatmul.mubr.bf16.gmra.mrb[0].mxu0 %v405
        %v725 = vpop.f32.mrb[0].mxu0
        %v726 = vadd.f32 0.0, %v725
        %v727 = vpop.f32.mrb[0].mxu0
        %v728 = vadd.f32 0.0, %v727
        %v729 = vpop.f32.mrb[0].mxu0
        %v730 = vadd.f32 0.0, %v729
        %v731 = vpop.f32.mrb[0].mxu0
        %v732 = vadd.f32 0.0, %v731
        %733 = vmatprep.mubr.bf16.mxu0 0
        %734 = vmatmul.mubr.bf16.gmra.mrb[0].mxu0 %v406
        %v735 = vpop.f32.mrb[0].mxu0
        %v736 = vadd.f32 0.0, %v735
        %v737 = vpop.f32.mrb[0].mxu0
        %v738 = vadd.f32 0.0, %v737
        %v739 = vpop.f32.mrb[0].mxu0
        %v740 = vadd.f32 0.0, %v739
        %v741 = vpop.f32.mrb[0].mxu0
        %v742 = vadd.f32 0.0, %v741
        %743 = vdwg.mxu0
        %744 = vmatprep.subr.bf16.mxu0 0
        %745 = vmatpush1.bf16.msra.mxu0 %v505
        %746 = vmatprep.subr.bf16.mxu0 0
        %747 = vmatpush1.bf16.msra.mxu0 %v508
        %748 = vmatprep.subr.bf16.mxu0 0
        %749 = vmatpush1.bf16.msra.mxu0 %v511
        %750 = vmatprep.subr.bf16.mxu0 0
        %751 = vmatpush1.bf16.msra.mxu0 %v514
        %752 = vmatprep.subr.bf16.mxu0 0
        %753 = vmatpush1.bf16.msra.mxu0 %v517
        %754 = vmatprep.subr.bf16.mxu0 0
        %755 = vmatpush1.bf16.msra.mxu0 %v520
        %756 = vmatprep.subr.bf16.mxu0 0
        %757 = vmatpush1.bf16.msra.mxu0 %v523
        %758 = vmatprep.subr.bf16.mxu0 0
        %759 = vmatpush1.bf16.msra.mxu0 %v526
        %760 = vmatprep.subr.bf16.mxu0 0
        %761 = vmatpush1.bf16.msra.mxu0 0
        %762 = vmatprep.subr.bf16.mxu0 0
        %763 = vmatpush1.bf16.msra.mxu0 0
        %764 = vmatprep.subr.bf16.mxu0 0
        %765 = vmatpush1.bf16.msra.mxu0 0
        %766 = vmatprep.subr.bf16.mxu0 0
        %767 = vmatpush1.bf16.msra.mxu0 0
        %768 = vmatprep.subr.bf16.mxu0 0
        %769 = vmatpush1.bf16.msra.mxu0 0
        %770 = vmatprep.subr.bf16.mxu0 0
        %771 = vmatpush1.bf16.msra.mxu0 0
        %772 = vmatprep.subr.bf16.mxu0 0
        %773 = vmatpush1.bf16.msra.mxu0 0
        %774 = vmatprep.subr.bf16.mxu0 0
        %775 = vmatpush1.bf16.msra.mxu0 0
        %776 = vmatprep.mubr.bf16.mxu0 0
        %777 = vmatmul.mubr.bf16.gmra.mrb[0].mxu0 %v391
        %v778 = vpop.f32.mrb[0].mxu0
        %v779 = vadd.f32 0.0, %v778
        %v780 = vpop.f32.mrb[0].mxu0
        %v781 = vpop.f32.mrb[0].mxu0
        %v782 = vadd.f32 0.0, %v781
        %v783 = vpop.f32.mrb[0].mxu0
        %784 = vmatprep.mubr.bf16.mxu0 0
        %785 = vmatmul.mubr.bf16.gmra.mrb[0].mxu0 %v392
        %v786 = vpop.f32.mrb[0].mxu0
        %v787 = vadd.f32 0.0, %v786
        %v788 = vpop.f32.mrb[0].mxu0
        %v789 = vpop.f32.mrb[0].mxu0
        %v790 = vadd.f32 0.0, %v789
        %v791 = vpop.f32.mrb[0].mxu0
        %792 = vmatprep.mubr.bf16.mxu0 0
        %793 = vmatmul.mubr.bf16.gmra.mrb[0].mxu0 %v393
        %v794 = vpop.f32.mrb[0].mxu0
        %v795 = vadd.f32 0.0, %v794
        %v796 = vpop.f32.mrb[0].mxu0
        %v797 = vpop.f32.mrb[0].mxu0
        %v798 = vadd.f32 0.0, %v797
        %v799 = vpop.f32.mrb[0].mxu0
        %800 = vmatprep.mubr.bf16.mxu0 0
        %801 = vmatmul.mubr.bf16.gmra.mrb[0].mxu0 %v394
        %v802 = vpop.f32.mrb[0].mxu0
        %v803 = vadd.f32 0.0, %v802
        %v804 = vpop.f32.mrb[0].mxu0
        %v805 = vpop.f32.mrb[0].mxu0
        %v806 = vadd.f32 0.0, %v805
        %v807 = vpop.f32.mrb[0].mxu0
        %808 = vmatprep.mubr.bf16.mxu0 0
        %809 = vmatmul.mubr.bf16.gmra.mrb[0].mxu0 %v395
        %v810 = vpop.f32.mrb[0].mxu0
        %v811 = vadd.f32 0.0, %v810
        %v812 = vpop.f32.mrb[0].mxu0
        %v813 = vpop.f32.mrb[0].mxu0
        %v814 = vadd.f32 0.0, %v813
        %v815 = vpop.f32.mrb[0].mxu0
        %816 = vmatprep.mubr.bf16.mxu0 0
        %817 = vmatmul.mubr.bf16.gmra.mrb[0].mxu0 %v396
        %v818 = vpop.f32.mrb[0].mxu0
        %v819 = vadd.f32 0.0, %v818
        %v820 = vpop.f32.mrb[0].mxu0
        %v821 = vpop.f32.mrb[0].mxu0
        %v822 = vadd.f32 0.0, %v821
        %v823 = vpop.f32.mrb[0].mxu0
        %824 = vmatprep.mubr.bf16.mxu0 0
        %825 = vmatmul.mubr.bf16.gmra.mrb[0].mxu0 %v397
        %v826 = vpop.f32.mrb[0].mxu0
        %v827 = vadd.f32 0.0, %v826
        %v828 = vpop.f32.mrb[0].mxu0
        %v829 = vpop.f32.mrb[0].mxu0
        %v830 = vadd.f32 0.0, %v829
        %v831 = vpop.f32.mrb[0].mxu0
        %832 = vmatprep.mubr.bf16.mxu0 0
        %833 = vmatmul.mubr.bf16.gmra.mrb[0].mxu0 %v398
        %v834 = vpop.f32.mrb[0].mxu0
        %v835 = vadd.f32 0.0, %v834
        %v836 = vpop.f32.mrb[0].mxu0
        %v837 = vpop.f32.mrb[0].mxu0
        %v838 = vadd.f32 0.0, %v837
        %v839 = vpop.f32.mrb[0].mxu0
        %840 = vmatprep.mubr.bf16.mxu0 0
        %841 = vmatmul.mubr.bf16.gmra.mrb[0].mxu0 %v399
        %v842 = vpop.f32.mrb[0].mxu0
        %v843 = vadd.f32 0.0, %v842
        %v844 = vpop.f32.mrb[0].mxu0
        %v845 = vpop.f32.mrb[0].mxu0
        %v846 = vadd.f32 0.0, %v845
        %v847 = vpop.f32.mrb[0].mxu0
        %848 = vmatprep.mubr.bf16.mxu0 0
        %849 = vmatmul.mubr.bf16.gmra.mrb[0].mxu0 %v400
        %v850 = vpop.f32.mrb[0].mxu0
        %v851 = vadd.f32 0.0, %v850
        %v852 = vpop.f32.mrb[0].mxu0
        %v853 = vpop.f32.mrb[0].mxu0
        %v854 = vadd.f32 0.0, %v853
        %v855 = vpop.f32.mrb[0].mxu0
        %856 = vmatprep.mubr.bf16.mxu0 0
        %857 = vmatmul.mubr.bf16.gmra.mrb[0].mxu0 %v401
        %v858 = vpop.f32.mrb[0].mxu0
        %v859 = vadd.f32 0.0, %v858
        %v860 = vpop.f32.mrb[0].mxu0
        %v861 = vpop.f32.mrb[0].mxu0
        %v862 = vadd.f32 0.0, %v861
        %v863 = vpop.f32.mrb[0].mxu0
        %864 = vmatprep.mubr.bf16.mxu0 0
        %865 = vmatmul.mubr.bf16.gmra.mrb[0].mxu0 %v402
        %v866 = vpop.f32.mrb[0].mxu0
        %v867 = vadd.f32 0.0, %v866
        %v868 = vpop.f32.mrb[0].mxu0
        %v869 = vpop.f32.mrb[0].mxu0
        %v870 = vadd.f32 0.0, %v869
        %v871 = vpop.f32.mrb[0].mxu0
        %872 = vmatprep.mubr.bf16.mxu0 0
        %873 = vmatmul.mubr.bf16.gmra.mrb[0].mxu0 %v403
        %v874 = vpop.f32.mrb[0].mxu0
        %v875 = vadd.f32 0.0, %v874
        %v876 = vpop.f32.mrb[0].mxu0
        %v877 = vpop.f32.mrb[0].mxu0
        %v878 = vadd.f32 0.0, %v877
        %v879 = vpop.f32.mrb[0].mxu0
        %880 = vmatprep.mubr.bf16.mxu0 0
        %881 = vmatmul.mubr.bf16.gmra.mrb[0].mxu0 %v404
        %v882 = vpop.f32.mrb[0].mxu0
        %v883 = vadd.f32 0.0, %v882
        %v884 = vpop.f32.mrb[0].mxu0
        %v885 = vpop.f32.mrb[0].mxu0
        %v886 = vadd.f32 0.0, %v885
        %v887 = vpop.f32.mrb[0].mxu0
        %888 = vmatprep.mubr.bf16.mxu0 0
        %889 = vmatmul.mubr.bf16.gmra.mrb[0].mxu0 %v405
        %v890 = vpop.f32.mrb[0].mxu0
        %v891 = vadd.f32 0.0, %v890
        %v892 = vpop.f32.mrb[0].mxu0
        %v893 = vpop.f32.mrb[0].mxu0
        %v894 = vadd.f32 0.0, %v893
        %v895 = vpop.f32.mrb[0].mxu0
        %896 = vmatprep.mubr.bf16.mxu0 0
        %897 = vmatmul.mubr.bf16.gmra.mrb[0].mxu0 %v406
        %v898 = vpop.f32.mrb[0].mxu0
        %v899 = vadd.f32 0.0, %v898
        %v900 = vpop.f32.mrb[0].mxu0
        %v901 = vpop.f32.mrb[0].mxu0
        %v902 = vadd.f32 0.0, %v901
        %v903 = vpop.f32.mrb[0].mxu0
        %904 = vdwg.mxu0
        %v905 = vld [vmem:[#allocation7] sm:$0xff]
        %v906 = vld [vmem:[#allocation7 + $0x8] sm:$0xf]
        %v907 = vld [vmem:[#allocation7 + $0xc] sm:$0xff]
        %v908 = vld [vmem:[#allocation7 + $0x14] sm:$0xf]
        %v909 = vld [vmem:[#allocation7 + $0x18] sm:$0xff]
        %v910 = vld [vmem:[#allocation7 + $0x20] sm:$0xf]
        %v911 = vld [vmem:[#allocation7 + $0x24] sm:$0xff]
        %v912 = vld [vmem:[#allocation7 + $0x2c] sm:$0xf]
        %v913 = vld [vmem:[#allocation7 + $0x30] sm:$0xff]
        %v914 = vld [vmem:[#allocation7 + $0x38] sm:$0xf]
        %v915 = vld [vmem:[#allocation7 + $0x3c] sm:$0xff]
        %v916 = vld [vmem:[#allocation7 + $0x44] sm:$0xf]
        %v917 = vld [vmem:[#allocation7 + $0x48] sm:$0xff]
        %v918 = vld [vmem:[#allocation7 + $0x50] sm:$0xf]
        %v919 = vld [vmem:[#allocation7 + $0x54] sm:$0xff]
        %v920 = vld [vmem:[#allocation7 + $0x5c] sm:$0xf]
        %v921 = vld [vmem:[#allocation7 + $0x60] sm:$0xff]
        %v922 = vld [vmem:[#allocation7 + $0x68] sm:$0xf]
        %v923 = vld [vmem:[#allocation7 + $0x6c] sm:$0xff]
        %v924 = vld [vmem:[#allocation7 + $0x74] sm:$0xf]
        %v925 = vld [vmem:[#allocation7 + $0x78] sm:$0xff]
        %v926 = vld [vmem:[#allocation7 + $0x80] sm:$0xf]
        %v927 = vld [vmem:[#allocation7 + $0x84] sm:$0xff]
        %v928 = vld [vmem:[#allocation7 + $0x8c] sm:$0xf]
        %v929 = vld [vmem:[#allocation7 + $0x90] sm:$0xff]
        %v930 = vld [vmem:[#allocation7 + $0x98] sm:$0xf]
        %v931 = vld [vmem:[#allocation7 + $0x9c] sm:$0xff]
        %v932 = vld [vmem:[#allocation7 + $0xa4] sm:$0xf]
        %v933 = vld [vmem:[#allocation7 + $0xa8] sm:$0xff]
        %v934 = vld [vmem:[#allocation7 + $0xb0] sm:$0xf]
        %v935 = vld [vmem:[#allocation7 + $0xb4] sm:$0xff]
        %v936 = vld [vmem:[#allocation7 + $0xbc] sm:$0xf]
        %v969 = vunpack.c.l.b16 %v905
        %v970 = vunpack.c.h.b16 %v905
        %v971 = vunpack.c.l.b16 %v906
        %v972 = vunpack.c.l.b16 %v907
        %v973 = vunpack.c.h.b16 %v907
        %v974 = vunpack.c.l.b16 %v908
        %v975 = vunpack.c.l.b16 %v909
        %v976 = vunpack.c.h.b16 %v909
        %v977 = vunpack.c.l.b16 %v910
        %v978 = vunpack.c.l.b16 %v911
        %v979 = vunpack.c.h.b16 %v911
        %v980 = vunpack.c.l.b16 %v912
        %v981 = vunpack.c.l.b16 %v913
        %v982 = vunpack.c.h.b16 %v913
        %v983 = vunpack.c.l.b16 %v914
        %v984 = vunpack.c.l.b16 %v915
        %v985 = vunpack.c.h.b16 %v915
        %v986 = vunpack.c.l.b16 %v916
        %v987 = vunpack.c.l.b16 %v917
        %v988 = vunpack.c.h.b16 %v917
        %v989 = vunpack.c.l.b16 %v918
        %v990 = vunpack.c.l.b16 %v919
        %v991 = vunpack.c.h.b16 %v919
        %v992 = vunpack.c.l.b16 %v920
        %v993 = vunpack.c.l.b16 %v921
        %v994 = vunpack.c.h.b16 %v921
        %v995 = vunpack.c.l.b16 %v922
        %v996 = vunpack.c.l.b16 %v923
        %v997 = vunpack.c.h.b16 %v923
        %v998 = vunpack.c.l.b16 %v924
        %v999 = vunpack.c.l.b16 %v925
        %v1000 = vunpack.c.h.b16 %v925
        %v1001 = vunpack.c.l.b16 %v926
        %v1002 = vunpack.c.l.b16 %v927
        %v1003 = vunpack.c.h.b16 %v927
        %v1004 = vunpack.c.l.b16 %v928
        %v1005 = vunpack.c.l.b16 %v929
        %v1006 = vunpack.c.h.b16 %v929
        %v1007 = vunpack.c.l.b16 %v930
        %v1008 = vunpack.c.l.b16 %v931
        %v1009 = vunpack.c.h.b16 %v931
        %v1010 = vunpack.c.l.b16 %v932
        %v1011 = vunpack.c.l.b16 %v933
        %v1012 = vunpack.c.h.b16 %v933
        %v1013 = vunpack.c.l.b16 %v934
        %v1014 = vunpack.c.l.b16 %v935
        %v1015 = vunpack.c.h.b16 %v935
        %v1016 = vunpack.c.l.b16 %v936
        %v1017 = vpack.c.b16 %v972, %v969
        %v1018 = vpack.c.b16 %v973, %v970
        %v1019 = vpack.c.b16 %v974, %v971
        %v1020 = vpack.c.b16 %v978, %v975
        %v1021 = vpack.c.b16 %v979, %v976
        %v1022 = vpack.c.b16 %v980, %v977
        %v1023 = vpack.c.b16 %v984, %v981
        %v1024 = vpack.c.b16 %v985, %v982
        %v1025 = vpack.c.b16 %v986, %v983
        %v1026 = vpack.c.b16 %v990, %v987
        %v1027 = vpack.c.b16 %v991, %v988
        %v1028 = vpack.c.b16 %v992, %v989
        %v1029 = vpack.c.b16 %v996, %v993
        %v1030 = vpack.c.b16 %v997, %v994
        %v1031 = vpack.c.b16 %v998, %v995
        %v1032 = vpack.c.b16 %v1002, %v999
        %v1033 = vpack.c.b16 %v1003, %v1000
        %v1034 = vpack.c.b16 %v1004, %v1001
        %v1035 = vpack.c.b16 %v1008, %v1005
        %v1036 = vpack.c.b16 %v1009, %v1006
        %v1037 = vpack.c.b16 %v1010, %v1007
        %v1038 = vpack.c.b16 %v1014, %v1011
        %v1039 = vpack.c.b16 %v1015, %v1012
        %v1040 = vpack.c.b16 %v1016, %v1013
        %1065 = vmatprep.subr.bf16.mxu0 %v1018
        %1066 = vmatpush1.bf16.msra.mxu0 %v1017
        %1067 = vmatprep.subr.bf16.mxu0 %v1021
        %1068 = vmatpush1.bf16.msra.mxu0 %v1020
        %1069 = vmatprep.subr.bf16.mxu0 %v1024
        %1070 = vmatpush1.bf16.msra.mxu0 %v1023
        %1071 = vmatprep.subr.bf16.mxu0 %v1027
        %1072 = vmatpush1.bf16.msra.mxu0 %v1026
        %1073 = vmatprep.subr.bf16.mxu0 %v1030
        %1074 = vmatpush1.bf16.msra.mxu0 %v1029
        %1075 = vmatprep.subr.bf16.mxu0 %v1033
        %1076 = vmatpush1.bf16.msra.mxu0 %v1032
        %1077 = vmatprep.subr.bf16.mxu0 %v1036
        %1078 = vmatpush1.bf16.msra.mxu0 %v1035
        %1079 = vmatprep.subr.bf16.mxu0 %v1039
        %1080 = vmatpush1.bf16.msra.mxu0 %v1038
        %1081 = vmatprep.subr.bf16.mxu0 0
        %1082 = vmatpush1.bf16.msra.mxu0 0
        %1083 = vmatprep.subr.bf16.mxu0 0
        %1084 = vmatpush1.bf16.msra.mxu0 0
        %1085 = vmatprep.subr.bf16.mxu0 0
        %1086 = vmatpush1.bf16.msra.mxu0 0
        %1087 = vmatprep.subr.bf16.mxu0 0
        %1088 = vmatpush1.bf16.msra.mxu0 0
        %1089 = vmatprep.subr.bf16.mxu0 0
        %1090 = vmatpush1.bf16.msra.mxu0 0
        %1091 = vmatprep.subr.bf16.mxu0 0
        %1092 = vmatpush1.bf16.msra.mxu0 0
        %1093 = vmatprep.subr.bf16.mxu0 0
        %1094 = vmatpush1.bf16.msra.mxu0 0
        %1095 = vmatprep.subr.bf16.mxu0 0
        %1096 = vmatpush1.bf16.msra.mxu0 0
        %1097 = vmatprep.mubr.bf16.mxu0 0
        %1098 = vmatmul.mubr.bf16.gmra.mrb[0].mxu0 %v391
        %v1099 = vpop.f32.mrb[0].mxu0
        %v1100 = vadd.f32 0.0, %v1099
        %v1101 = vpop.f32.mrb[0].mxu0
        %v1102 = vadd.f32 0.0, %v1101
        %v1103 = vpop.f32.mrb[0].mxu0
        %v1104 = vadd.f32 0.0, %v1103
        %v1105 = vpop.f32.mrb[0].mxu0
        %v1106 = vadd.f32 0.0, %v1105
        %1107 = vmatprep.mubr.bf16.mxu0 0
        %1108 = vmatmul.mubr.bf16.gmra.mrb[0].mxu0 %v392
        %v1109 = vpop.f32.mrb[0].mxu0
        %v1110 = vadd.f32 0.0, %v1109
        %v1111 = vpop.f32.mrb[0].mxu0
        %v1112 = vadd.f32 0.0, %v1111
        %v1113 = vpop.f32.mrb[0].mxu0
        %v1114 = vadd.f32 0.0, %v1113
        %v1115 = vpop.f32.mrb[0].mxu0
        %v1116 = vadd.f32 0.0, %v1115
        %1117 = vmatprep.mubr.bf16.mxu0 0
        %1118 = vmatmul.mubr.bf16.gmra.mrb[0].mxu0 %v393
        %v1119 = vpop.f32.mrb[0].mxu0
        %v1120 = vadd.f32 0.0, %v1119
        %v1121 = vpop.f32.mrb[0].mxu0
        %v1122 = vadd.f32 0.0, %v1121
        %v1123 = vpop.f32.mrb[0].mxu0
        %v1124 = vadd.f32 0.0, %v1123
        %v1125 = vpop.f32.mrb[0].mxu0
        %v1126 = vadd.f32 0.0, %v1125
        %1127 = vmatprep.mubr.bf16.mxu0 0
        %1128 = vmatmul.mubr.bf16.gmra.mrb[0].mxu0 %v394
        %v1129 = vpop.f32.mrb[0].mxu0
        %v1130 = vadd.f32 0.0, %v1129
        %v1131 = vpop.f32.mrb[0].mxu0
        %v1132 = vadd.f32 0.0, %v1131
        %v1133 = vpop.f32.mrb[0].mxu0
        %v1134 = vadd.f32 0.0, %v1133
        %v1135 = vpop.f32.mrb[0].mxu0
        %v1136 = vadd.f32 0.0, %v1135
        %1137 = vmatprep.mubr.bf16.mxu0 0
        %1138 = vmatmul.mubr.bf16.gmra.mrb[0].mxu0 %v395
        %v1139 = vpop.f32.mrb[0].mxu0
        %v1140 = vadd.f32 0.0, %v1139
        %v1141 = vpop.f32.mrb[0].mxu0
        %v1142 = vadd.f32 0.0, %v1141
        %v1143 = vpop.f32.mrb[0].mxu0
        %v1144 = vadd.f32 0.0, %v1143
        %v1145 = vpop.f32.mrb[0].mxu0
        %v1146 = vadd.f32 0.0, %v1145
        %1147 = vmatprep.mubr.bf16.mxu0 0
        %1148 = vmatmul.mubr.bf16.gmra.mrb[0].mxu0 %v396
        %v1149 = vpop.f32.mrb[0].mxu0
        %v1150 = vadd.f32 0.0, %v1149
        %v1151 = vpop.f32.mrb[0].mxu0
        %v1152 = vadd.f32 0.0, %v1151
        %v1153 = vpop.f32.mrb[0].mxu0
        %v1154 = vadd.f32 0.0, %v1153
        %v1155 = vpop.f32.mrb[0].mxu0
        %v1156 = vadd.f32 0.0, %v1155
        %1157 = vmatprep.mubr.bf16.mxu0 0
        %1158 = vmatmul.mubr.bf16.gmra.mrb[0].mxu0 %v397
        %v1159 = vpop.f32.mrb[0].mxu0
        %v1160 = vadd.f32 0.0, %v1159
        %v1161 = vpop.f32.mrb[0].mxu0
        %v1162 = vadd.f32 0.0, %v1161
        %v1163 = vpop.f32.mrb[0].mxu0
        %v1164 = vadd.f32 0.0, %v1163
        %v1165 = vpop.f32.mrb[0].mxu0
        %v1166 = vadd.f32 0.0, %v1165
        %1167 = vmatprep.mubr.bf16.mxu0 0
        %1168 = vmatmul.mubr.bf16.gmra.mrb[0].mxu0 %v398
        %v1169 = vpop.f32.mrb[0].mxu0
        %v1170 = vadd.f32 0.0, %v1169
        %v1171 = vpop.f32.mrb[0].mxu0
        %v1172 = vadd.f32 0.0, %v1171
        %v1173 = vpop.f32.mrb[0].mxu0
        %v1174 = vadd.f32 0.0, %v1173
        %v1175 = vpop.f32.mrb[0].mxu0
        %v1176 = vadd.f32 0.0, %v1175
        %1177 = vmatprep.mubr.bf16.mxu0 0
        %1178 = vmatmul.mubr.bf16.gmra.mrb[0].mxu0 %v399
        %v1179 = vpop.f32.mrb[0].mxu0
        %v1180 = vadd.f32 0.0, %v1179
        %v1181 = vpop.f32.mrb[0].mxu0
        %v1182 = vadd.f32 0.0, %v1181
        %v1183 = vpop.f32.mrb[0].mxu0
        %v1184 = vadd.f32 0.0, %v1183
        %v1185 = vpop.f32.mrb[0].mxu0
        %v1186 = vadd.f32 0.0, %v1185
        %1187 = vmatprep.mubr.bf16.mxu0 0
        %1188 = vmatmul.mubr.bf16.gmra.mrb[0].mxu0 %v400
        %v1189 = vpop.f32.mrb[0].mxu0
        %v1190 = vadd.f32 0.0, %v1189
        %v1191 = vpop.f32.mrb[0].mxu0
        %v1192 = vadd.f32 0.0, %v1191
        %v1193 = vpop.f32.mrb[0].mxu0
        %v1194 = vadd.f32 0.0, %v1193
        %v1195 = vpop.f32.mrb[0].mxu0
        %v1196 = vadd.f32 0.0, %v1195
        %1197 = vmatprep.mubr.bf16.mxu0 0
        %1198 = vmatmul.mubr.bf16.gmra.mrb[0].mxu0 %v401
        %v1199 = vpop.f32.mrb[0].mxu0
        %v1200 = vadd.f32 0.0, %v1199
        %v1201 = vpop.f32.mrb[0].mxu0
        %v1202 = vadd.f32 0.0, %v1201
        %v1203 = vpop.f32.mrb[0].mxu0
        %v1204 = vadd.f32 0.0, %v1203
        %v1205 = vpop.f32.mrb[0].mxu0
        %v1206 = vadd.f32 0.0, %v1205
        %1207 = vmatprep.mubr.bf16.mxu0 0
        %1208 = vmatmul.mubr.bf16.gmra.mrb[0].mxu0 %v402
        %v1209 = vpop.f32.mrb[0].mxu0
        %v1210 = vadd.f32 0.0, %v1209
        %v1211 = vpop.f32.mrb[0].mxu0
        %v1212 = vadd.f32 0.0, %v1211
        %v1213 = vpop.f32.mrb[0].mxu0
        %v1214 = vadd.f32 0.0, %v1213
        %v1215 = vpop.f32.mrb[0].mxu0
        %v1216 = vadd.f32 0.0, %v1215
        %1217 = vmatprep.mubr.bf16.mxu0 0
        %1218 = vmatmul.mubr.bf16.gmra.mrb[0].mxu0 %v403
        %v1219 = vpop.f32.mrb[0].mxu0
        %v1220 = vadd.f32 0.0, %v1219
        %v1221 = vpop.f32.mrb[0].mxu0
        %v1222 = vadd.f32 0.0, %v1221
        %v1223 = vpop.f32.mrb[0].mxu0
        %v1224 = vadd.f32 0.0, %v1223
        %v1225 = vpop.f32.mrb[0].mxu0
        %v1226 = vadd.f32 0.0, %v1225
        %1227 = vmatprep.mubr.bf16.mxu0 0
        %1228 = vmatmul.mubr.bf16.gmra.mrb[0].mxu0 %v404
        %v1229 = vpop.f32.mrb[0].mxu0
        %v1230 = vadd.f32 0.0, %v1229
        %v1231 = vpop.f32.mrb[0].mxu0
        %v1232 = vadd.f32 0.0, %v1231
        %v1233 = vpop.f32.mrb[0].mxu0
        %v1234 = vadd.f32 0.0, %v1233
        %v1235 = vpop.f32.mrb[0].mxu0
        %v1236 = vadd.f32 0.0, %v1235
        %1237 = vmatprep.mubr.bf16.mxu0 0
        %1238 = vmatmul.mubr.bf16.gmra.mrb[0].mxu0 %v405
        %v1239 = vpop.f32.mrb[0].mxu0
        %v1240 = vadd.f32 0.0, %v1239
        %v1241 = vpop.f32.mrb[0].mxu0
        %v1242 = vadd.f32 0.0, %v1241
        %v1243 = vpop.f32.mrb[0].mxu0
        %v1244 = vadd.f32 0.0, %v1243
        %v1245 = vpop.f32.mrb[0].mxu0
        %v1246 = vadd.f32 0.0, %v1245
        %1247 = vmatprep.mubr.bf16.mxu0 0
        %1248 = vmatmul.mubr.bf16.gmra.mrb[0].mxu0 %v406
        %v1249 = vpop.f32.mrb[0].mxu0
        %v1250 = vadd.f32 0.0, %v1249
        %v1251 = vpop.f32.mrb[0].mxu0
        %v1252 = vadd.f32 0.0, %v1251
        %v1253 = vpop.f32.mrb[0].mxu0
        %v1254 = vadd.f32 0.0, %v1253
        %v1255 = vpop.f32.mrb[0].mxu0
        %v1256 = vadd.f32 0.0, %v1255
        %1257 = vdwg.mxu0
        %1258 = vmatprep.subr.bf16.mxu0 0
        %1259 = vmatpush1.bf16.msra.mxu0 %v1019
        %1260 = vmatprep.subr.bf16.mxu0 0
        %1261 = vmatpush1.bf16.msra.mxu0 %v1022
        %1262 = vmatprep.subr.bf16.mxu0 0
        %1263 = vmatpush1.bf16.msra.mxu0 %v1025
        %1264 = vmatprep.subr.bf16.mxu0 0
        %1265 = vmatpush1.bf16.msra.mxu0 %v1028
        %1266 = vmatprep.subr.bf16.mxu0 0
        %1267 = vmatpush1.bf16.msra.mxu0 %v1031
        %1268 = vmatprep.subr.bf16.mxu0 0
        %1269 = vmatpush1.bf16.msra.mxu0 %v1034
        %1270 = vmatprep.subr.bf16.mxu0 0
        %1271 = vmatpush1.bf16.msra.mxu0 %v1037
        %1272 = vmatprep.subr.bf16.mxu0 0
        %1273 = vmatpush1.bf16.msra.mxu0 %v1040
        %1274 = vmatprep.subr.bf16.mxu0 0
        %1275 = vmatpush1.bf16.msra.mxu0 0
        %1276 = vmatprep.subr.bf16.mxu0 0
        %1277 = vmatpush1.bf16.msra.mxu0 0
        %1278 = vmatprep.subr.bf16.mxu0 0
        %1279 = vmatpush1.bf16.msra.mxu0 0
        %1280 = vmatprep.subr.bf16.mxu0 0
        %1281 = vmatpush1.bf16.msra.mxu0 0
        %1282 = vmatprep.subr.bf16.mxu0 0
        %1283 = vmatpush1.bf16.msra.mxu0 0
        %1284 = vmatprep.subr.bf16.mxu0 0
        %1285 = vmatpush1.bf16.msra.mxu0 0
        %1286 = vmatprep.subr.bf16.mxu0 0
        %1287 = vmatpush1.bf16.msra.mxu0 0
        %1288 = vmatprep.subr.bf16.mxu0 0
        %1289 = vmatpush1.bf16.msra.mxu0 0
        %1290 = vmatprep.mubr.bf16.mxu0 0
        %1291 = vmatmul.mubr.bf16.gmra.mrb[0].mxu0 %v391
        %v1292 = vpop.f32.mrb[0].mxu0
        %v1293 = vadd.f32 0.0, %v1292
        %v1294 = vpop.f32.mrb[0].mxu0
        %v1295 = vpop.f32.mrb[0].mxu0
        %v1296 = vadd.f32 0.0, %v1295
        %v1297 = vpop.f32.mrb[0].mxu0
        %1298 = vmatprep.mubr.bf16.mxu0 0
        %1299 = vmatmul.mubr.bf16.gmra.mrb[0].mxu0 %v392
        %v1300 = vpop.f32.mrb[0].mxu0
        %v1301 = vadd.f32 0.0, %v1300
        %v1302 = vpop.f32.mrb[0].mxu0
        %v1303 = vpop.f32.mrb[0].mxu0
        %v1304 = vadd.f32 0.0, %v1303
        %v1305 = vpop.f32.mrb[0].mxu0
        %1306 = vmatprep.mubr.bf16.mxu0 0
        %1307 = vmatmul.mubr.bf16.gmra.mrb[0].mxu0 %v393
        %v1308 = vpop.f32.mrb[0].mxu0
        %v1309 = vadd.f32 0.0, %v1308
        %v1310 = vpop.f32.mrb[0].mxu0
        %v1311 = vpop.f32.mrb[0].mxu0
        %v1312 = vadd.f32 0.0, %v1311
        %v1313 = vpop.f32.mrb[0].mxu0
        %1314 = vmatprep.mubr.bf16.mxu0 0
        %1315 = vmatmul.mubr.bf16.gmra.mrb[0].mxu0 %v394
        %v1316 = vpop.f32.mrb[0].mxu0
        %v1317 = vadd.f32 0.0, %v1316
        %v1318 = vpop.f32.mrb[0].mxu0
        %v1319 = vpop.f32.mrb[0].mxu0
        %v1320 = vadd.f32 0.0, %v1319
        %v1321 = vpop.f32.mrb[0].mxu0
        %1322 = vmatprep.mubr.bf16.mxu0 0
        %1323 = vmatmul.mubr.bf16.gmra.mrb[0].mxu0 %v395
        %v1324 = vpop.f32.mrb[0].mxu0
        %v1325 = vadd.f32 0.0, %v1324
        %v1326 = vpop.f32.mrb[0].mxu0
        %v1327 = vpop.f32.mrb[0].mxu0
        %v1328 = vadd.f32 0.0, %v1327
        %v1329 = vpop.f32.mrb[0].mxu0
        %1330 = vmatprep.mubr.bf16.mxu0 0
        %1331 = vmatmul.mubr.bf16.gmra.mrb[0].mxu0 %v396
        %v1332 = vpop.f32.mrb[0].mxu0
        %v1333 = vadd.f32 0.0, %v1332
        %v1334 = vpop.f32.mrb[0].mxu0
        %v1335 = vpop.f32.mrb[0].mxu0
        %v1336 = vadd.f32 0.0, %v1335
        %v1337 = vpop.f32.mrb[0].mxu0
        %1338 = vmatprep.mubr.bf16.mxu0 0
        %1339 = vmatmul.mubr.bf16.gmra.mrb[0].mxu0 %v397
        %v1340 = vpop.f32.mrb[0].mxu0
        %v1341 = vadd.f32 0.0, %v1340
        %v1342 = vpop.f32.mrb[0].mxu0
        %v1343 = vpop.f32.mrb[0].mxu0
        %v1344 = vadd.f32 0.0, %v1343
        %v1345 = vpop.f32.mrb[0].mxu0
        %1346 = vmatprep.mubr.bf16.mxu0 0
        %1347 = vmatmul.mubr.bf16.gmra.mrb[0].mxu0 %v398
        %v1348 = vpop.f32.mrb[0].mxu0
        %v1349 = vadd.f32 0.0, %v1348
        %v1350 = vpop.f32.mrb[0].mxu0
        %v1351 = vpop.f32.mrb[0].mxu0
        %v1352 = vadd.f32 0.0, %v1351
        %v1353 = vpop.f32.mrb[0].mxu0
        %1354 = vmatprep.mubr.bf16.mxu0 0
        %1355 = vmatmul.mubr.bf16.gmra.mrb[0].mxu0 %v399
        %v1356 = vpop.f32.mrb[0].mxu0
        %v1357 = vadd.f32 0.0, %v1356
        %v1358 = vpop.f32.mrb[0].mxu0
        %v1359 = vpop.f32.mrb[0].mxu0
        %v1360 = vadd.f32 0.0, %v1359
        %v1361 = vpop.f32.mrb[0].mxu0
        %1362 = vmatprep.mubr.bf16.mxu0 0
        %1363 = vmatmul.mubr.bf16.gmra.mrb[0].mxu0 %v400
        %v1364 = vpop.f32.mrb[0].mxu0
        %v1365 = vadd.f32 0.0, %v1364
        %v1366 = vpop.f32.mrb[0].mxu0
        %v1367 = vpop.f32.mrb[0].mxu0
        %v1368 = vadd.f32 0.0, %v1367
        %v1369 = vpop.f32.mrb[0].mxu0
        %1370 = vmatprep.mubr.bf16.mxu0 0
        %1371 = vmatmul.mubr.bf16.gmra.mrb[0].mxu0 %v401
        %v1372 = vpop.f32.mrb[0].mxu0
        %v1373 = vadd.f32 0.0, %v1372
        %v1374 = vpop.f32.mrb[0].mxu0
        %v1375 = vpop.f32.mrb[0].mxu0
        %v1376 = vadd.f32 0.0, %v1375
        %v1377 = vpop.f32.mrb[0].mxu0
        %1378 = vmatprep.mubr.bf16.mxu0 0
        %1379 = vmatmul.mubr.bf16.gmra.mrb[0].mxu0 %v402
        %v1380 = vpop.f32.mrb[0].mxu0
        %v1381 = vadd.f32 0.0, %v1380
        %v1382 = vpop.f32.mrb[0].mxu0
        %v1383 = vpop.f32.mrb[0].mxu0
        %v1384 = vadd.f32 0.0, %v1383
        %v1385 = vpop.f32.mrb[0].mxu0
        %1386 = vmatprep.mubr.bf16.mxu0 0
        %1387 = vmatmul.mubr.bf16.gmra.mrb[0].mxu0 %v403
        %v1388 = vpop.f32.mrb[0].mxu0
        %v1389 = vadd.f32 0.0, %v1388
        %v1390 = vpop.f32.mrb[0].mxu0
        %v1391 = vpop.f32.mrb[0].mxu0
        %v1392 = vadd.f32 0.0, %v1391
        %v1393 = vpop.f32.mrb[0].mxu0
        %1394 = vmatprep.mubr.bf16.mxu0 0
        %1395 = vmatmul.mubr.bf16.gmra.mrb[0].mxu0 %v404
        %v1396 = vpop.f32.mrb[0].mxu0
        %v1397 = vadd.f32 0.0, %v1396
        %v1398 = vpop.f32.mrb[0].mxu0
        %v1399 = vpop.f32.mrb[0].mxu0
        %v1400 = vadd.f32 0.0, %v1399
        %v1401 = vpop.f32.mrb[0].mxu0
        %1402 = vmatprep.mubr.bf16.mxu0 0
        %1403 = vmatmul.mubr.bf16.gmra.mrb[0].mxu0 %v405
        %v1404 = vpop.f32.mrb[0].mxu0
        %v1405 = vadd.f32 0.0, %v1404
        %v1406 = vpop.f32.mrb[0].mxu0
        %v1407 = vpop.f32.mrb[0].mxu0
        %v1408 = vadd.f32 0.0, %v1407
        %v1409 = vpop.f32.mrb[0].mxu0
        %1410 = vmatprep.mubr.bf16.mxu0 0
        %1411 = vmatmul.mubr.bf16.gmra.mrb[0].mxu0 %v406
        %v1412 = vpop.f32.mrb[0].mxu0
        %v1413 = vadd.f32 0.0, %v1412
        %v1414 = vpop.f32.mrb[0].mxu0
        %v1415 = vpop.f32.mrb[0].mxu0
        %v1416 = vadd.f32 0.0, %v1415
        %v1417 = vpop.f32.mrb[0].mxu0
        %1418 = vdwg.mxu0
        %v1419 = vsub.f32 0.0, %v586
        %v1420 = vsub.f32 0.0, %v588
        %v1421 = vsub.f32 0.0, %v779
        %v1422 = vsub.f32 0.0, %v590
        %v1423 = vsub.f32 0.0, %v592
        %v1424 = vsub.f32 0.0, %v782
        %v1425 = vsub.f32 0.0, %v596
        %v1426 = vsub.f32 0.0, %v598
        %v1427 = vsub.f32 0.0, %v787
        %v1428 = vsub.f32 0.0, %v600
        %v1429 = vsub.f32 0.0, %v602
        %v1430 = vsub.f32 0.0, %v790
        %v1431 = vsub.f32 0.0, %v606
        %v1432 = vsub.f32 0.0, %v608
        %v1433 = vsub.f32 0.0, %v795
        %v1434 = vsub.f32 0.0, %v610
        %v1435 = vsub.f32 0.0, %v612
        %v1436 = vsub.f32 0.0, %v798
        %v1437 = vsub.f32 0.0, %v616
        %v1438 = vsub.f32 0.0, %v618
        %v1439 = vsub.f32 0.0, %v803
        %v1440 = vsub.f32 0.0, %v620
        %v1441 = vsub.f32 0.0, %v622
        %v1442 = vsub.f32 0.0, %v806
        %v1443 = vsub.f32 0.0, %v626
        %v1444 = vsub.f32 0.0, %v628
        %v1445 = vsub.f32 0.0, %v811
        %v1446 = vsub.f32 0.0, %v630
        %v1447 = vsub.f32 0.0, %v632
        %v1448 = vsub.f32 0.0, %v814
        %v1449 = vsub.f32 0.0, %v636
        %v1450 = vsub.f32 0.0, %v638
        %v1451 = vsub.f32 0.0, %v819
        %v1452 = vsub.f32 0.0, %v640
        %v1453 = vsub.f32 0.0, %v642
        %v1454 = vsub.f32 0.0, %v822
        %v1455 = vsub.f32 0.0, %v646
        %v1456 = vsub.f32 0.0, %v648
        %v1457 = vsub.f32 0.0, %v827
        %v1458 = vsub.f32 0.0, %v650
        %v1459 = vsub.f32 0.0, %v652
        %v1460 = vsub.f32 0.0, %v830
        %v1461 = vsub.f32 0.0, %v656
        %v1462 = vsub.f32 0.0, %v658
        %v1463 = vsub.f32 0.0, %v835
        %v1464 = vsub.f32 0.0, %v660
        %v1465 = vsub.f32 0.0, %v662
        %v1466 = vsub.f32 0.0, %v838
        %v1467 = vsub.f32 0.0, %v666
        %v1468 = vsub.f32 0.0, %v668
        %v1469 = vsub.f32 0.0, %v843
        %v1470 = vsub.f32 0.0, %v670
        %v1471 = vsub.f32 0.0, %v672
        %v1472 = vsub.f32 0.0, %v846
        %v1473 = vsub.f32 0.0, %v676
        %v1474 = vsub.f32 0.0, %v678
        %v1475 = vsub.f32 0.0, %v851
        %v1476 = vsub.f32 0.0, %v680
        %v1477 = vsub.f32 0.0, %v682
        %v1478 = vsub.f32 0.0, %v854
        %v1479 = vsub.f32 0.0, %v686
        %v1480 = vsub.f32 0.0, %v688
        %v1481 = vsub.f32 0.0, %v859
        %v1482 = vsub.f32 0.0, %v690
        %v1483 = vsub.f32 0.0, %v692
        %v1484 = vsub.f32 0.0, %v862
        %v1485 = vsub.f32 0.0, %v696
        %v1486 = vsub.f32 0.0, %v698
        %v1487 = vsub.f32 0.0, %v867
        %v1488 = vsub.f32 0.0, %v700
        %v1489 = vsub.f32 0.0, %v702
        %v1490 = vsub.f32 0.0, %v870
        %v1491 = vsub.f32 0.0, %v706
        %v1492 = vsub.f32 0.0, %v708
        %v1493 = vsub.f32 0.0, %v875
        %v1494 = vsub.f32 0.0, %v710
        %v1495 = vsub.f32 0.0, %v712
        %v1496 = vsub.f32 0.0, %v878
        %v1497 = vsub.f32 0.0, %v716
        %v1498 = vsub.f32 0.0, %v718
        %v1499 = vsub.f32 0.0, %v883
        %v1500 = vsub.f32 0.0, %v720
        %v1501 = vsub.f32 0.0, %v722
        %v1502 = vsub.f32 0.0, %v886
        %v1503 = vsub.f32 0.0, %v726
        %v1504 = vsub.f32 0.0, %v728
        %v1505 = vsub.f32 0.0, %v891
        %v1506 = vsub.f32 0.0, %v730
        %v1507 = vsub.f32 0.0, %v732
        %v1508 = vsub.f32 0.0, %v894
        %v1509 = vsub.f32 0.0, %v736
        %v1510 = vsub.f32 0.0, %v738
        %v1511 = vsub.f32 0.0, %v899
        %v1512 = vsub.f32 0.0, %v740
        %v1513 = vsub.f32 0.0, %v742
        %v1514 = vsub.f32 0.0, %v902
        %v1515 = vmul.f32 %v1419, 1.442695
        %v1516 = vpow.pop %v1515
        %v1517 = vmul.f32 %v1420, 1.442695
        %v1518 = vpow.pop %v1517
        %v1519 = vmul.f32 %v1421, 1.442695
        %v1520 = vpow.pop %v1519
        %v1521 = vmul.f32 %v1422, 1.442695
        %v1522 = vpow.pop %v1521
        %v1523 = vmul.f32 %v1423, 1.442695
        %v1524 = vpow.pop %v1523
        %v1525 = vmul.f32 %v1424, 1.442695
        %v1526 = vpow.pop %v1525
        %v1527 = vmul.f32 %v1425, 1.442695
        %v1528 = vpow.pop %v1527
        %v1529 = vmul.f32 %v1426, 1.442695
        %v1530 = vpow.pop %v1529
        %v1531 = vmul.f32 %v1427, 1.442695
        %v1532 = vpow.pop %v1531
        %v1533 = vmul.f32 %v1428, 1.442695
        %v1534 = vpow.pop %v1533
        %v1535 = vmul.f32 %v1429, 1.442695
        %v1536 = vpow.pop %v1535
        %v1537 = vmul.f32 %v1430, 1.442695
        %v1538 = vpow.pop %v1537
        %v1539 = vmul.f32 %v1431, 1.442695
        %v1540 = vpow.pop %v1539
        %v1541 = vmul.f32 %v1432, 1.442695
        %v1542 = vpow.pop %v1541
        %v1543 = vmul.f32 %v1433, 1.442695
        %v1544 = vpow.pop %v1543
        %v1545 = vmul.f32 %v1434, 1.442695
        %v1546 = vpow.pop %v1545
        %v1547 = vmul.f32 %v1435, 1.442695
        %v1548 = vpow.pop %v1547
        %v1549 = vmul.f32 %v1436, 1.442695
        %v1550 = vpow.pop %v1549
        %v1551 = vmul.f32 %v1437, 1.442695
        %v1552 = vpow.pop %v1551
        %v1553 = vmul.f32 %v1438, 1.442695
        %v1554 = vpow.pop %v1553
        %v1555 = vmul.f32 %v1439, 1.442695
        %v1556 = vpow.pop %v1555
        %v1557 = vmul.f32 %v1440, 1.442695
        %v1558 = vpow.pop %v1557
        %v1559 = vmul.f32 %v1441, 1.442695
        %v1560 = vpow.pop %v1559
        %v1561 = vmul.f32 %v1442, 1.442695
        %v1562 = vpow.pop %v1561
        %v1563 = vmul.f32 %v1443, 1.442695
        %v1564 = vpow.pop %v1563
        %v1565 = vmul.f32 %v1444, 1.442695
        %v1566 = vpow.pop %v1565
        %v1567 = vmul.f32 %v1445, 1.442695
        %v1568 = vpow.pop %v1567
        %v1569 = vmul.f32 %v1446, 1.442695
        %v1570 = vpow.pop %v1569
        %v1571 = vmul.f32 %v1447, 1.442695
        %v1572 = vpow.pop %v1571
        %v1573 = vmul.f32 %v1448, 1.442695
        %v1574 = vpow.pop %v1573
        %v1575 = vmul.f32 %v1449, 1.442695
        %v1576 = vpow.pop %v1575
        %v1577 = vmul.f32 %v1450, 1.442695
        %v1578 = vpow.pop %v1577
        %v1579 = vmul.f32 %v1451, 1.442695
        %v1580 = vpow.pop %v1579
        %v1581 = vmul.f32 %v1452, 1.442695
        %v1582 = vpow.pop %v1581
        %v1583 = vmul.f32 %v1453, 1.442695
        %v1584 = vpow.pop %v1583
        %v1585 = vmul.f32 %v1454, 1.442695
        %v1586 = vpow.pop %v1585
        %v1587 = vmul.f32 %v1455, 1.442695
        %v1588 = vpow.pop %v1587
        %v1589 = vmul.f32 %v1456, 1.442695
        %v1590 = vpow.pop %v1589
        %v1591 = vmul.f32 %v1457, 1.442695
        %v1592 = vpow.pop %v1591
        %v1593 = vmul.f32 %v1458, 1.442695
        %v1594 = vpow.pop %v1593
        %v1595 = vmul.f32 %v1459, 1.442695
        %v1596 = vpow.pop %v1595
        %v1597 = vmul.f32 %v1460, 1.442695
        %v1598 = vpow.pop %v1597
        %v1599 = vmul.f32 %v1461, 1.442695
        %v1600 = vpow.pop %v1599
        %v1601 = vmul.f32 %v1462, 1.442695
        %v1602 = vpow.pop %v1601
        %v1603 = vmul.f32 %v1463, 1.442695
        %v1604 = vpow.pop %v1603
        %v1605 = vmul.f32 %v1464, 1.442695
        %v1606 = vpow.pop %v1605
        %v1607 = vmul.f32 %v1465, 1.442695
        %v1608 = vpow.pop %v1607
        %v1609 = vmul.f32 %v1466, 1.442695
        %v1610 = vpow.pop %v1609
        %v1611 = vmul.f32 %v1467, 1.442695
        %v1612 = vpow.pop %v1611
        %v1613 = vmul.f32 %v1468, 1.442695
        %v1614 = vpow.pop %v1613
        %v1615 = vmul.f32 %v1469, 1.442695
        %v1616 = vpow.pop %v1615
        %v1617 = vmul.f32 %v1470, 1.442695
        %v1618 = vpow.pop %v1617
        %v1619 = vmul.f32 %v1471, 1.442695
        %v1620 = vpow.pop %v1619
        %v1621 = vmul.f32 %v1472, 1.442695
        %v1622 = vpow.pop %v1621
        %v1623 = vmul.f32 %v1473, 1.442695
        %v1624 = vpow.pop %v1623
        %v1625 = vmul.f32 %v1474, 1.442695
        %v1626 = vpow.pop %v1625
        %v1627 = vmul.f32 %v1475, 1.442695
        %v1628 = vpow.pop %v1627
        %v1629 = vmul.f32 %v1476, 1.442695
        %v1630 = vpow.pop %v1629
        %v1631 = vmul.f32 %v1477, 1.442695
        %v1632 = vpow.pop %v1631
        %v1633 = vmul.f32 %v1478, 1.442695
        %v1634 = vpow.pop %v1633
        %v1635 = vmul.f32 %v1479, 1.442695
        %v1636 = vpow.pop %v1635
        %v1637 = vmul.f32 %v1480, 1.442695
        %v1638 = vpow.pop %v1637
        %v1639 = vmul.f32 %v1481, 1.442695
        %v1640 = vpow.pop %v1639
        %v1641 = vmul.f32 %v1482, 1.442695
        %v1642 = vpow.pop %v1641
        %v1643 = vmul.f32 %v1483, 1.442695
        %v1644 = vpow.pop %v1643
        %v1645 = vmul.f32 %v1484, 1.442695
        %v1646 = vpow.pop %v1645
        %v1647 = vmul.f32 %v1485, 1.442695
        %v1648 = vpow.pop %v1647
        %v1649 = vmul.f32 %v1486, 1.442695
        %v1650 = vpow.pop %v1649
        %v1651 = vmul.f32 %v1487, 1.442695
        %v1652 = vpow.pop %v1651
        %v1653 = vmul.f32 %v1488, 1.442695
        %v1654 = vpow.pop %v1653
        %v1655 = vmul.f32 %v1489, 1.442695
        %v1656 = vpow.pop %v1655
        %v1657 = vmul.f32 %v1490, 1.442695
        %v1658 = vpow.pop %v1657
        %v1659 = vmul.f32 %v1491, 1.442695
        %v1660 = vpow.pop %v1659
        %v1661 = vmul.f32 %v1492, 1.442695
        %v1662 = vpow.pop %v1661
        %v1663 = vmul.f32 %v1493, 1.442695
        %v1664 = vpow.pop %v1663
        %v1665 = vmul.f32 %v1494, 1.442695
        %v1666 = vpow.pop %v1665
        %v1667 = vmul.f32 %v1495, 1.442695
        %v1668 = vpow.pop %v1667
        %v1669 = vmul.f32 %v1496, 1.442695
        %v1670 = vpow.pop %v1669
        %v1671 = vmul.f32 %v1497, 1.442695
        %v1672 = vpow.pop %v1671
        %v1673 = vmul.f32 %v1498, 1.442695
        %v1674 = vpow.pop %v1673
        %v1675 = vmul.f32 %v1499, 1.442695
        %v1676 = vpow.pop %v1675
        %v1677 = vmul.f32 %v1500, 1.442695
        %v1678 = vpow.pop %v1677
        %v1679 = vmul.f32 %v1501, 1.442695
        %v1680 = vpow.pop %v1679
        %v1681 = vmul.f32 %v1502, 1.442695
        %v1682 = vpow.pop %v1681
        %v1683 = vmul.f32 %v1503, 1.442695
        %v1684 = vpow.pop %v1683
        %v1685 = vmul.f32 %v1504, 1.442695
        %v1686 = vpow.pop %v1685
        %v1687 = vmul.f32 %v1505, 1.442695
        %v1688 = vpow.pop %v1687
        %v1689 = vmul.f32 %v1506, 1.442695
        %v1690 = vpow.pop %v1689
        %v1691 = vmul.f32 %v1507, 1.442695
        %v1692 = vpow.pop %v1691
        %v1693 = vmul.f32 %v1508, 1.442695
        %v1694 = vpow.pop %v1693
        %v1695 = vmul.f32 %v1509, 1.442695
        %v1696 = vpow.pop %v1695
        %v1697 = vmul.f32 %v1510, 1.442695
        %v1698 = vpow.pop %v1697
        %v1699 = vmul.f32 %v1511, 1.442695
        %v1700 = vpow.pop %v1699
        %v1701 = vmul.f32 %v1512, 1.442695
        %v1702 = vpow.pop %v1701
        %v1703 = vmul.f32 %v1513, 1.442695
        %v1704 = vpow.pop %v1703
        %v1705 = vmul.f32 %v1514, 1.442695
        %v1706 = vpow.pop %v1705
        %v1707 = vadd.f32 %v1516, 1.0
        %v1708 = vadd.f32 %v1518, 1.0
        %v1709 = vadd.f32 %v1520, 1.0
        %v1710 = vadd.f32 %v1522, 1.0
        %v1711 = vadd.f32 %v1524, 1.0
        %v1712 = vadd.f32 %v1526, 1.0
        %v1713 = vadd.f32 %v1528, 1.0
        %v1714 = vadd.f32 %v1530, 1.0
        %v1715 = vadd.f32 %v1532, 1.0
        %v1716 = vadd.f32 %v1534, 1.0
        %v1717 = vadd.f32 %v1536, 1.0
        %v1718 = vadd.f32 %v1538, 1.0
        %v1719 = vadd.f32 %v1540, 1.0
        %v1720 = vadd.f32 %v1542, 1.0
        %v1721 = vadd.f32 %v1544, 1.0
        %v1722 = vadd.f32 %v1546, 1.0
        %v1723 = vadd.f32 %v1548, 1.0
        %v1724 = vadd.f32 %v1550, 1.0
        %v1725 = vadd.f32 %v1552, 1.0
        %v1726 = vadd.f32 %v1554, 1.0
        %v1727 = vadd.f32 %v1556, 1.0
        %v1728 = vadd.f32 %v1558, 1.0
        %v1729 = vadd.f32 %v1560, 1.0
        %v1730 = vadd.f32 %v1562, 1.0
        %v1731 = vadd.f32 %v1564, 1.0
        %v1732 = vadd.f32 %v1566, 1.0
        %v1733 = vadd.f32 %v1568, 1.0
        %v1734 = vadd.f32 %v1570, 1.0
        %v1735 = vadd.f32 %v1572, 1.0
        %v1736 = vadd.f32 %v1574, 1.0
        %v1737 = vadd.f32 %v1576, 1.0
        %v1738 = vadd.f32 %v1578, 1.0
        %v1739 = vadd.f32 %v1580, 1.0
        %v1740 = vadd.f32 %v1582, 1.0
        %v1741 = vadd.f32 %v1584, 1.0
        %v1742 = vadd.f32 %v1586, 1.0
        %v1743 = vadd.f32 %v1588, 1.0
        %v1744 = vadd.f32 %v1590, 1.0
        %v1745 = vadd.f32 %v1592, 1.0
        %v1746 = vadd.f32 %v1594, 1.0
        %v1747 = vadd.f32 %v1596, 1.0
        %v1748 = vadd.f32 %v1598, 1.0
        %v1749 = vadd.f32 %v1600, 1.0
        %v1750 = vadd.f32 %v1602, 1.0
        %v1751 = vadd.f32 %v1604, 1.0
        %v1752 = vadd.f32 %v1606, 1.0
        %v1753 = vadd.f32 %v1608, 1.0
        %v1754 = vadd.f32 %v1610, 1.0
        %v1755 = vadd.f32 %v1612, 1.0
        %v1756 = vadd.f32 %v1614, 1.0
        %v1757 = vadd.f32 %v1616, 1.0
        %v1758 = vadd.f32 %v1618, 1.0
        %v1759 = vadd.f32 %v1620, 1.0
        %v1760 = vadd.f32 %v1622, 1.0
        %v1761 = vadd.f32 %v1624, 1.0
        %v1762 = vadd.f32 %v1626, 1.0
        %v1763 = vadd.f32 %v1628, 1.0
        %v1764 = vadd.f32 %v1630, 1.0
        %v1765 = vadd.f32 %v1632, 1.0
        %v1766 = vadd.f32 %v1634, 1.0
        %v1767 = vadd.f32 %v1636, 1.0
        %v1768 = vadd.f32 %v1638, 1.0
        %v1769 = vadd.f32 %v1640, 1.0
        %v1770 = vadd.f32 %v1642, 1.0
        %v1771 = vadd.f32 %v1644, 1.0
        %v1772 = vadd.f32 %v1646, 1.0
        %v1773 = vadd.f32 %v1648, 1.0
        %v1774 = vadd.f32 %v1650, 1.0
        %v1775 = vadd.f32 %v1652, 1.0
        %v1776 = vadd.f32 %v1654, 1.0
        %v1777 = vadd.f32 %v1656, 1.0
        %v1778 = vadd.f32 %v1658, 1.0
        %v1779 = vadd.f32 %v1660, 1.0
        %v1780 = vadd.f32 %v1662, 1.0
        %v1781 = vadd.f32 %v1664, 1.0
        %v1782 = vadd.f32 %v1666, 1.0
        %v1783 = vadd.f32 %v1668, 1.0
        %v1784 = vadd.f32 %v1670, 1.0
        %v1785 = vadd.f32 %v1672, 1.0
        %v1786 = vadd.f32 %v1674, 1.0
        %v1787 = vadd.f32 %v1676, 1.0
        %v1788 = vadd.f32 %v1678, 1.0
        %v1789 = vadd.f32 %v1680, 1.0
        %v1790 = vadd.f32 %v1682, 1.0
        %v1791 = vadd.f32 %v1684, 1.0
        %v1792 = vadd.f32 %v1686, 1.0
        %v1793 = vadd.f32 %v1688, 1.0
        %v1794 = vadd.f32 %v1690, 1.0
        %v1795 = vadd.f32 %v1692, 1.0
        %v1796 = vadd.f32 %v1694, 1.0
        %v1797 = vadd.f32 %v1696, 1.0
        %v1798 = vadd.f32 %v1698, 1.0
        %v1799 = vadd.f32 %v1700, 1.0
        %v1800 = vadd.f32 %v1702, 1.0
        %v1801 = vadd.f32 %v1704, 1.0
        %v1802 = vadd.f32 %v1706, 1.0
        %v1803 = vrcp.pop %v1707
        %v1804 = vrcp.pop %v1708
        %v1805 = vrcp.pop %v1709
        %v1806 = vrcp.pop %v1710
        %v1807 = vrcp.pop %v1711
        %v1808 = vrcp.pop %v1712
        %v1809 = vrcp.pop %v1713
        %v1810 = vrcp.pop %v1714
        %v1811 = vrcp.pop %v1715
        %v1812 = vrcp.pop %v1716
        %v1813 = vrcp.pop %v1717
        %v1814 = vrcp.pop %v1718
        %v1815 = vrcp.pop %v1719
        %v1816 = vrcp.pop %v1720
        %v1817 = vrcp.pop %v1721
        %v1818 = vrcp.pop %v1722
        %v1819 = vrcp.pop %v1723
        %v1820 = vrcp.pop %v1724
        %v1821 = vrcp.pop %v1725
        %v1822 = vrcp.pop %v1726
        %v1823 = vrcp.pop %v1727
        %v1824 = vrcp.pop %v1728
        %v1825 = vrcp.pop %v1729
        %v1826 = vrcp.pop %v1730
        %v1827 = vrcp.pop %v1731
        %v1828 = vrcp.pop %v1732
        %v1829 = vrcp.pop %v1733
        %v1830 = vrcp.pop %v1734
        %v1831 = vrcp.pop %v1735
        %v1832 = vrcp.pop %v1736
        %v1833 = vrcp.pop %v1737
        %v1834 = vrcp.pop %v1738
        %v1835 = vrcp.pop %v1739
        %v1836 = vrcp.pop %v1740
        %v1837 = vrcp.pop %v1741
        %v1838 = vrcp.pop %v1742
        %v1839 = vrcp.pop %v1743
        %v1840 = vrcp.pop %v1744
        %v1841 = vrcp.pop %v1745
        %v1842 = vrcp.pop %v1746
        %v1843 = vrcp.pop %v1747
        %v1844 = vrcp.pop %v1748
        %v1845 = vrcp.pop %v1749
        %v1846 = vrcp.pop %v1750
        %v1847 = vrcp.pop %v1751
        %v1848 = vrcp.pop %v1752
        %v1849 = vrcp.pop %v1753
        %v1850 = vrcp.pop %v1754
        %v1851 = vrcp.pop %v1755
        %v1852 = vrcp.pop %v1756
        %v1853 = vrcp.pop %v1757
        %v1854 = vrcp.pop %v1758
        %v1855 = vrcp.pop %v1759
        %v1856 = vrcp.pop %v1760
        %v1857 = vrcp.pop %v1761
        %v1858 = vrcp.pop %v1762
        %v1859 = vrcp.pop %v1763
        %v1860 = vrcp.pop %v1764
        %v1861 = vrcp.pop %v1765
        %v1862 = vrcp.pop %v1766
        %v1863 = vrcp.pop %v1767
        %v1864 = vrcp.pop %v1768
        %v1865 = vrcp.pop %v1769
        %v1866 = vrcp.pop %v1770
        %v1867 = vrcp.pop %v1771
        %v1868 = vrcp.pop %v1772
        %v1869 = vrcp.pop %v1773
        %v1870 = vrcp.pop %v1774
        %v1871 = vrcp.pop %v1775
        %v1872 = vrcp.pop %v1776
        %v1873 = vrcp.pop %v1777
        %v1874 = vrcp.pop %v1778
        %v1875 = vrcp.pop %v1779
        %v1876 = vrcp.pop %v1780
        %v1877 = vrcp.pop %v1781
        %v1878 = vrcp.pop %v1782
        %v1879 = vrcp.pop %v1783
        %v1880 = vrcp.pop %v1784
        %v1881 = vrcp.pop %v1785
        %v1882 = vrcp.pop %v1786
        %v1883 = vrcp.pop %v1787
        %v1884 = vrcp.pop %v1788
        %v1885 = vrcp.pop %v1789
        %v1886 = vrcp.pop %v1790
        %v1887 = vrcp.pop %v1791
        %v1888 = vrcp.pop %v1792
        %v1889 = vrcp.pop %v1793
        %v1890 = vrcp.pop %v1794
        %v1891 = vrcp.pop %v1795
        %v1892 = vrcp.pop %v1796
        %v1893 = vrcp.pop %v1797
        %v1894 = vrcp.pop %v1798
        %v1895 = vrcp.pop %v1799
        %v1896 = vrcp.pop %v1800
        %v1897 = vrcp.pop %v1801
        %v1898 = vrcp.pop %v1802
        %v1899 = vmul.f32 %v586, %v1803
        %v1900 = vmul.f32 %v588, %v1804
        %v1901 = vmul.f32 %v779, %v1805
        %v1902 = vmul.f32 %v590, %v1806
        %v1903 = vmul.f32 %v592, %v1807
        %v1904 = vmul.f32 %v782, %v1808
        %v1905 = vmul.f32 %v596, %v1809
        %v1906 = vmul.f32 %v598, %v1810
        %v1907 = vmul.f32 %v787, %v1811
        %v1908 = vmul.f32 %v600, %v1812
        %v1909 = vmul.f32 %v602, %v1813
        %v1910 = vmul.f32 %v790, %v1814
        %v1911 = vmul.f32 %v606, %v1815
        %v1912 = vmul.f32 %v608, %v1816
        %v1913 = vmul.f32 %v795, %v1817
        %v1914 = vmul.f32 %v610, %v1818
        %v1915 = vmul.f32 %v612, %v1819
        %v1916 = vmul.f32 %v798, %v1820
        %v1917 = vmul.f32 %v616, %v1821
        %v1918 = vmul.f32 %v618, %v1822
        %v1919 = vmul.f32 %v803, %v1823
        %v1920 = vmul.f32 %v620, %v1824
        %v1921 = vmul.f32 %v622, %v1825
        %v1922 = vmul.f32 %v806, %v1826
        %v1923 = vmul.f32 %v626, %v1827
        %v1924 = vmul.f32 %v628, %v1828
        %v1925 = vmul.f32 %v811, %v1829
        %v1926 = vmul.f32 %v630, %v1830
        %v1927 = vmul.f32 %v632, %v1831
        %v1928 = vmul.f32 %v814, %v1832
        %v1929 = vmul.f32 %v636, %v1833
        %v1930 = vmul.f32 %v638, %v1834
        %v1931 = vmul.f32 %v819, %v1835
        %v1932 = vmul.f32 %v640, %v1836
        %v1933 = vmul.f32 %v642, %v1837
        %v1934 = vmul.f32 %v822, %v1838
        %v1935 = vmul.f32 %v646, %v1839
        %v1936 = vmul.f32 %v648, %v1840
        %v1937 = vmul.f32 %v827, %v1841
        %v1938 = vmul.f32 %v650, %v1842
        %v1939 = vmul.f32 %v652, %v1843
        %v1940 = vmul.f32 %v830, %v1844
        %v1941 = vmul.f32 %v656, %v1845
        %v1942 = vmul.f32 %v658, %v1846
        %v1943 = vmul.f32 %v835, %v1847
        %v1944 = vmul.f32 %v660, %v1848
        %v1945 = vmul.f32 %v662, %v1849
        %v1946 = vmul.f32 %v838, %v1850
        %v1947 = vmul.f32 %v666, %v1851
        %v1948 = vmul.f32 %v668, %v1852
        %v1949 = vmul.f32 %v843, %v1853
        %v1950 = vmul.f32 %v670, %v1854
        %v1951 = vmul.f32 %v672, %v1855
        %v1952 = vmul.f32 %v846, %v1856
        %v1953 = vmul.f32 %v676, %v1857
        %v1954 = vmul.f32 %v678, %v1858
        %v1955 = vmul.f32 %v851, %v1859
        %v1956 = vmul.f32 %v680, %v1860
        %v1957 = vmul.f32 %v682, %v1861
        %v1958 = vmul.f32 %v854, %v1862
        %v1959 = vmul.f32 %v686, %v1863
        %v1960 = vmul.f32 %v688, %v1864
        %v1961 = vmul.f32 %v859, %v1865
        %v1962 = vmul.f32 %v690, %v1866
        %v1963 = vmul.f32 %v692, %v1867
        %v1964 = vmul.f32 %v862, %v1868
        %v1965 = vmul.f32 %v696, %v1869
        %v1966 = vmul.f32 %v698, %v1870
        %v1967 = vmul.f32 %v867, %v1871
        %v1968 = vmul.f32 %v700, %v1872
        %v1969 = vmul.f32 %v702, %v1873
        %v1970 = vmul.f32 %v870, %v1874
        %v1971 = vmul.f32 %v706, %v1875
        %v1972 = vmul.f32 %v708, %v1876
        %v1973 = vmul.f32 %v875, %v1877
        %v1974 = vmul.f32 %v710, %v1878
        %v1975 = vmul.f32 %v712, %v1879
        %v1976 = vmul.f32 %v878, %v1880
        %v1977 = vmul.f32 %v716, %v1881
        %v1978 = vmul.f32 %v718, %v1882
        %v1979 = vmul.f32 %v883, %v1883
        %v1980 = vmul.f32 %v720, %v1884
        %v1981 = vmul.f32 %v722, %v1885
        %v1982 = vmul.f32 %v886, %v1886
        %v1983 = vmul.f32 %v726, %v1887
        %v1984 = vmul.f32 %v728, %v1888
        %v1985 = vmul.f32 %v891, %v1889
        %v1986 = vmul.f32 %v730, %v1890
        %v1987 = vmul.f32 %v732, %v1891
        %v1988 = vmul.f32 %v894, %v1892
        %v1989 = vmul.f32 %v736, %v1893
        %v1990 = vmul.f32 %v738, %v1894
        %v1991 = vmul.f32 %v899, %v1895
        %v1992 = vmul.f32 %v740, %v1896
        %v1993 = vmul.f32 %v742, %v1897
        %v1994 = vmul.f32 %v902, %v1898
        %v1995 = vmul.f32 %v1899, %v1100
        %v1996 = vmul.f32 %v1900, %v1102
        %v1997 = vmul.f32 %v1901, %v1293
        %v1998 = vmul.f32 %v1902, %v1104
        %v1999 = vmul.f32 %v1903, %v1106
        %v2000 = vmul.f32 %v1904, %v1296
        %v2001 = vmul.f32 %v1905, %v1110
        %v2002 = vmul.f32 %v1906, %v1112
        %v2003 = vmul.f32 %v1907, %v1301
        %v2004 = vmul.f32 %v1908, %v1114
        %v2005 = vmul.f32 %v1909, %v1116
        %v2006 = vmul.f32 %v1910, %v1304
        %v2007 = vmul.f32 %v1911, %v1120
        %v2008 = vmul.f32 %v1912, %v1122
        %v2009 = vmul.f32 %v1913, %v1309
        %v2010 = vmul.f32 %v1914, %v1124
        %v2011 = vmul.f32 %v1915, %v1126
        %v2012 = vmul.f32 %v1916, %v1312
        %v2013 = vmul.f32 %v1917, %v1130
        %v2014 = vmul.f32 %v1918, %v1132
        %v2015 = vmul.f32 %v1919, %v1317
        %v2016 = vmul.f32 %v1920, %v1134
        %v2017 = vmul.f32 %v1921, %v1136
        %v2018 = vmul.f32 %v1922, %v1320
        %v2019 = vmul.f32 %v1923, %v1140
        %v2020 = vmul.f32 %v1924, %v1142
        %v2021 = vmul.f32 %v1925, %v1325
        %v2022 = vmul.f32 %v1926, %v1144
        %v2023 = vmul.f32 %v1927, %v1146
        %v2024 = vmul.f32 %v1928, %v1328
        %v2025 = vmul.f32 %v1929, %v1150
        %v2026 = vmul.f32 %v1930, %v1152
        %v2027 = vmul.f32 %v1931, %v1333
        %v2028 = vmul.f32 %v1932, %v1154
        %v2029 = vmul.f32 %v1933, %v1156
        %v2030 = vmul.f32 %v1934, %v1336
        %v2031 = vmul.f32 %v1935, %v1160
        %v2032 = vmul.f32 %v1936, %v1162
        %v2033 = vmul.f32 %v1937, %v1341
        %v2034 = vmul.f32 %v1938, %v1164
        %v2035 = vmul.f32 %v1939, %v1166
        %v2036 = vmul.f32 %v1940, %v1344
        %v2037 = vmul.f32 %v1941, %v1170
        %v2038 = vmul.f32 %v1942, %v1172
        %v2039 = vmul.f32 %v1943, %v1349
        %v2040 = vmul.f32 %v1944, %v1174
        %v2041 = vmul.f32 %v1945, %v1176
        %v2042 = vmul.f32 %v1946, %v1352
        %v2043 = vmul.f32 %v1947, %v1180
        %v2044 = vmul.f32 %v1948, %v1182
        %v2045 = vmul.f32 %v1949, %v1357
        %v2046 = vmul.f32 %v1950, %v1184
        %v2047 = vmul.f32 %v1951, %v1186
        %v2048 = vmul.f32 %v1952, %v1360
        %v2049 = vmul.f32 %v1953, %v1190
        %v2050 = vmul.f32 %v1954, %v1192
        %v2051 = vmul.f32 %v1955, %v1365
        %v2052 = vmul.f32 %v1956, %v1194
        %v2053 = vmul.f32 %v1957, %v1196
        %v2054 = vmul.f32 %v1958, %v1368
        %v2055 = vmul.f32 %v1959, %v1200
        %v2056 = vmul.f32 %v1960, %v1202
        %v2057 = vmul.f32 %v1961, %v1373
        %v2058 = vmul.f32 %v1962, %v1204
        %v2059 = vmul.f32 %v1963, %v1206
        %v2060 = vmul.f32 %v1964, %v1376
        %v2061 = vmul.f32 %v1965, %v1210
        %v2062 = vmul.f32 %v1966, %v1212
        %v2063 = vmul.f32 %v1967, %v1381
        %v2064 = vmul.f32 %v1968, %v1214
        %v2065 = vmul.f32 %v1969, %v1216
        %v2066 = vmul.f32 %v1970, %v1384
        %v2067 = vmul.f32 %v1971, %v1220
        %v2068 = vmul.f32 %v1972, %v1222
        %v2069 = vmul.f32 %v1973, %v1389
        %v2070 = vmul.f32 %v1974, %v1224
        %v2071 = vmul.f32 %v1975, %v1226
        %v2072 = vmul.f32 %v1976, %v1392
        %v2073 = vmul.f32 %v1977, %v1230
        %v2074 = vmul.f32 %v1978, %v1232
        %v2075 = vmul.f32 %v1979, %v1397
        %v2076 = vmul.f32 %v1980, %v1234
        %v2077 = vmul.f32 %v1981, %v1236
        %v2078 = vmul.f32 %v1982, %v1400
        %v2079 = vmul.f32 %v1983, %v1240
        %v2080 = vmul.f32 %v1984, %v1242
        %v2081 = vmul.f32 %v1985, %v1405
        %v2082 = vmul.f32 %v1986, %v1244
        %v2083 = vmul.f32 %v1987, %v1246
        %v2084 = vmul.f32 %v1988, %v1408
        %v2085 = vmul.f32 %v1989, %v1250
        %v2086 = vmul.f32 %v1990, %v1252
        %v2087 = vmul.f32 %v1991, %v1413
        %v2088 = vmul.f32 %v1992, %v1254
        %v2089 = vmul.f32 %v1993, %v1256
        %v2090 = vmul.f32 %v1994, %v1416
        %v2091 = vpack.c.bf16 %v1998, %v1995
        %v2092 = vpack.c.bf16 %v1999, %v1996
        %v2093 = vpack.c.bf16 %v2000, %v1997
        %v2094 = vpack.c.bf16 %v2004, %v2001
        %v2095 = vpack.c.bf16 %v2005, %v2002
        %v2096 = vpack.c.bf16 %v2006, %v2003
        %v2097 = vpack.c.bf16 %v2010, %v2007
        %v2098 = vpack.c.bf16 %v2011, %v2008
        %v2099 = vpack.c.bf16 %v2012, %v2009
        %v2100 = vpack.c.bf16 %v2016, %v2013
        %v2101 = vpack.c.bf16 %v2017, %v2014
        %v2102 = vpack.c.bf16 %v2018, %v2015
        %v2103 = vpack.c.bf16 %v2022, %v2019
        %v2104 = vpack.c.bf16 %v2023, %v2020
        %v2105 = vpack.c.bf16 %v2024, %v2021
        %v2106 = vpack.c.bf16 %v2028, %v2025
        %v2107 = vpack.c.bf16 %v2029, %v2026
        %v2108 = vpack.c.bf16 %v2030, %v2027
        %v2109 = vpack.c.bf16 %v2034, %v2031
        %v2110 = vpack.c.bf16 %v2035, %v2032
        %v2111 = vpack.c.bf16 %v2036, %v2033
        %v2112 = vpack.c.bf16 %v2040, %v2037
        %v2113 = vpack.c.bf16 %v2041, %v2038
        %v2114 = vpack.c.bf16 %v2042, %v2039
        %v2115 = vpack.c.bf16 %v2046, %v2043
        %v2116 = vpack.c.bf16 %v2047, %v2044
        %v2117 = vpack.c.bf16 %v2048, %v2045
        %v2118 = vpack.c.bf16 %v2052, %v2049
        %v2119 = vpack.c.bf16 %v2053, %v2050
        %v2120 = vpack.c.bf16 %v2054, %v2051
        %v2121 = vpack.c.bf16 %v2058, %v2055
        %v2122 = vpack.c.bf16 %v2059, %v2056
        %v2123 = vpack.c.bf16 %v2060, %v2057
        %v2124 = vpack.c.bf16 %v2064, %v2061
        %v2125 = vpack.c.bf16 %v2065, %v2062
        %v2126 = vpack.c.bf16 %v2066, %v2063
        %v2127 = vpack.c.bf16 %v2070, %v2067
        %v2128 = vpack.c.bf16 %v2071, %v2068
        %v2129 = vpack.c.bf16 %v2072, %v2069
        %v2130 = vpack.c.bf16 %v2076, %v2073
        %v2131 = vpack.c.bf16 %v2077, %v2074
        %v2132 = vpack.c.bf16 %v2078, %v2075
        %v2133 = vpack.c.bf16 %v2082, %v2079
        %v2134 = vpack.c.bf16 %v2083, %v2080
        %v2135 = vpack.c.bf16 %v2084, %v2081
        %v2136 = vpack.c.bf16 %v2088, %v2085
        %v2137 = vpack.c.bf16 %v2089, %v2086
        %v2138 = vpack.c.bf16 %v2090, %v2087
        %v2139 = vld [vmem:[#allocation8] sm:$0xf]
        %v2140 = vld [vmem:[#allocation8 + $0x4] sm:$0xf]
        %v2141 = vld [vmem:[#allocation8 + $0x8] sm:$0xf]
        %v2142 = vld [vmem:[#allocation8 + $0xc] sm:$0xf]
        %v2143 = vld [vmem:[#allocation8 + $0x10] sm:$0xf]
        %v2144 = vld [vmem:[#allocation8 + $0x14] sm:$0xf]
        %v2145 = vld [vmem:[#allocation8 + $0x18] sm:$0xf]
        %v2146 = vld [vmem:[#allocation8 + $0x1c] sm:$0xf]
        %v2147 = vld [vmem:[#allocation8 + $0x20] sm:$0xf]
        %v2148 = vld [vmem:[#allocation8 + $0x24] sm:$0xf]
        %v2149 = vld [vmem:[#allocation8 + $0x28] sm:$0xf]
        %v2150 = vld [vmem:[#allocation8 + $0x2c] sm:$0xf]
        %v2151 = vld [vmem:[#allocation8 + $0x30] sm:$0xf]
        %v2152 = vld [vmem:[#allocation8 + $0x34] sm:$0xf]
        %v2153 = vld [vmem:[#allocation8 + $0x38] sm:$0xf]
        %v2154 = vld [vmem:[#allocation8 + $0x3c] sm:$0xf]
        %v2155 = vld [vmem:[#allocation8 + $0x40] sm:$0xf]
        %v2156 = vld [vmem:[#allocation8 + $0x44] sm:$0xf]
        %v2157 = vld [vmem:[#allocation8 + $0x48] sm:$0xf]
        %v2158 = vld [vmem:[#allocation8 + $0x4c] sm:$0xf]
        %v2159 = vld [vmem:[#allocation8 + $0x50] sm:$0xf]
        %v2160 = vld [vmem:[#allocation8 + $0x54] sm:$0xf]
        %v2161 = vld [vmem:[#allocation8 + $0x58] sm:$0xf]
        %v2162 = vld [vmem:[#allocation8 + $0x5c] sm:$0xf]
        %v2163 = vld [vmem:[#allocation8 + $0x60] sm:$0xf]
        %v2164 = vld [vmem:[#allocation8 + $0x64] sm:$0xf]
        %v2165 = vld [vmem:[#allocation8 + $0x68] sm:$0xf]
        %v2166 = vld [vmem:[#allocation8 + $0x6c] sm:$0xf]
        %v2167 = vld [vmem:[#allocation8 + $0x70] sm:$0xf]
        %v2168 = vld [vmem:[#allocation8 + $0x74] sm:$0xf]
        %v2169 = vld [vmem:[#allocation8 + $0x78] sm:$0xf]
        %v2170 = vld [vmem:[#allocation8 + $0x7c] sm:$0xf]
        %v2171 = vld [vmem:[#allocation8 + $0x80] sm:$0xf]
        %v2172 = vld [vmem:[#allocation8 + $0x84] sm:$0xf]
        %v2173 = vld [vmem:[#allocation8 + $0x88] sm:$0xf]
        %v2174 = vld [vmem:[#allocation8 + $0x8c] sm:$0xf]
        %v2175 = vld [vmem:[#allocation8 + $0x90] sm:$0xf]
        %v2176 = vld [vmem:[#allocation8 + $0x94] sm:$0xf]
        %v2177 = vld [vmem:[#allocation8 + $0x98] sm:$0xf]
        %v2178 = vld [vmem:[#allocation8 + $0x9c] sm:$0xf]
        %v2179 = vld [vmem:[#allocation8 + $0xa0] sm:$0xf]
        %v2180 = vld [vmem:[#allocation8 + $0xa4] sm:$0xf]
        %v2181 = vld [vmem:[#allocation8 + $0xa8] sm:$0xf]
        %v2182 = vld [vmem:[#allocation8 + $0xac] sm:$0xf]
        %v2183 = vld [vmem:[#allocation8 + $0xb0] sm:$0xf]
        %v2184 = vld [vmem:[#allocation8 + $0xb4] sm:$0xf]
        %v2185 = vld [vmem:[#allocation8 + $0xb8] sm:$0xf]
        %v2186 = vld [vmem:[#allocation8 + $0xbc] sm:$0xf]
        %v2235 = vunpack.c.l.b16 %v2139
        %v2236 = vunpack.c.l.b16 %v2140
        %v2237 = vunpack.c.l.b16 %v2141
        %v2238 = vunpack.c.l.b16 %v2142
        %v2239 = vunpack.c.l.b16 %v2143
        %v2240 = vunpack.c.l.b16 %v2144
        %v2241 = vunpack.c.l.b16 %v2145
        %v2242 = vunpack.c.l.b16 %v2146
        %v2243 = vunpack.c.l.b16 %v2147
        %v2244 = vunpack.c.l.b16 %v2148
        %v2245 = vunpack.c.l.b16 %v2149
        %v2246 = vunpack.c.l.b16 %v2150
        %v2247 = vunpack.c.l.b16 %v2151
        %v2248 = vunpack.c.l.b16 %v2152
        %v2249 = vunpack.c.l.b16 %v2153
        %v2250 = vunpack.c.l.b16 %v2154
        %v2251 = vunpack.c.l.b16 %v2155
        %v2252 = vunpack.c.l.b16 %v2156
        %v2253 = vunpack.c.l.b16 %v2157
        %v2254 = vunpack.c.l.b16 %v2158
        %v2255 = vunpack.c.l.b16 %v2159
        %v2256 = vunpack.c.l.b16 %v2160
        %v2257 = vunpack.c.l.b16 %v2161
        %v2258 = vunpack.c.l.b16 %v2162
        %v2259 = vunpack.c.l.b16 %v2163
        %v2260 = vunpack.c.l.b16 %v2164
        %v2261 = vunpack.c.l.b16 %v2165
        %v2262 = vunpack.c.l.b16 %v2166
        %v2263 = vunpack.c.l.b16 %v2167
        %v2264 = vunpack.c.l.b16 %v2168
        %v2265 = vunpack.c.l.b16 %v2169
        %v2266 = vunpack.c.l.b16 %v2170
        %v2267 = vunpack.c.l.b16 %v2171
        %v2268 = vunpack.c.l.b16 %v2172
        %v2269 = vunpack.c.l.b16 %v2173
        %v2270 = vunpack.c.l.b16 %v2174
        %v2271 = vunpack.c.l.b16 %v2175
        %v2272 = vunpack.c.l.b16 %v2176
        %v2273 = vunpack.c.l.b16 %v2177
        %v2274 = vunpack.c.l.b16 %v2178
        %v2275 = vunpack.c.l.b16 %v2179
        %v2276 = vunpack.c.l.b16 %v2180
        %v2277 = vunpack.c.l.b16 %v2181
        %v2278 = vunpack.c.l.b16 %v2182
        %v2279 = vunpack.c.l.b16 %v2183
        %v2280 = vunpack.c.l.b16 %v2184
        %v2281 = vunpack.c.l.b16 %v2185
        %v2282 = vunpack.c.l.b16 %v2186
        %v2283 = vpack.c.b16 %v2236, %v2235
        %v2284 = vpack.c.b16 %v2238, %v2237
        %v2285 = vpack.c.b16 %v2240, %v2239
        %v2286 = vpack.c.b16 %v2242, %v2241
        %v2287 = vpack.c.b16 %v2244, %v2243
        %v2288 = vpack.c.b16 %v2246, %v2245
        %v2289 = vpack.c.b16 %v2248, %v2247
        %v2290 = vpack.c.b16 %v2250, %v2249
        %v2291 = vpack.c.b16 %v2252, %v2251
        %v2292 = vpack.c.b16 %v2254, %v2253
        %v2293 = vpack.c.b16 %v2256, %v2255
        %v2294 = vpack.c.b16 %v2258, %v2257
        %v2295 = vpack.c.b16 %v2260, %v2259
        %v2296 = vpack.c.b16 %v2262, %v2261
        %v2297 = vpack.c.b16 %v2264, %v2263
        %v2298 = vpack.c.b16 %v2266, %v2265
        %v2299 = vpack.c.b16 %v2268, %v2267
        %v2300 = vpack.c.b16 %v2270, %v2269
        %v2301 = vpack.c.b16 %v2272, %v2271
        %v2302 = vpack.c.b16 %v2274, %v2273
        %v2303 = vpack.c.b16 %v2276, %v2275
        %v2304 = vpack.c.b16 %v2278, %v2277
        %v2305 = vpack.c.b16 %v2280, %v2279
        %v2306 = vpack.c.b16 %v2282, %v2281
        %2331 = vmatprep.subr.bf16.mxu0 0
        %2332 = vmatpush1.bf16.msra.mxu0 %v2283
        %2333 = vmatprep.subr.bf16.mxu0 0
        %2334 = vmatpush1.bf16.msra.mxu0 %v2284
        %2335 = vmatprep.subr.bf16.mxu0 0
        %2336 = vmatpush1.bf16.msra.mxu0 %v2285
        %2337 = vmatprep.subr.bf16.mxu0 0
        %2338 = vmatpush1.bf16.msra.mxu0 %v2286
        %2339 = vmatprep.subr.bf16.mxu0 0
        %2340 = vmatpush1.bf16.msra.mxu0 %v2287
        %2341 = vmatprep.subr.bf16.mxu0 0
        %2342 = vmatpush1.bf16.msra.mxu0 %v2288
        %2343 = vmatprep.subr.bf16.mxu0 0
        %2344 = vmatpush1.bf16.msra.mxu0 %v2289
        %2345 = vmatprep.subr.bf16.mxu0 0
        %2346 = vmatpush1.bf16.msra.mxu0 %v2290
        %2347 = vmatprep.subr.bf16.mxu0 0
        %2348 = vmatpush1.bf16.msra.mxu0 %v2291
        %2349 = vmatprep.subr.bf16.mxu0 0
        %2350 = vmatpush1.bf16.msra.mxu0 %v2292
        %2351 = vmatprep.subr.bf16.mxu0 0
        %2352 = vmatpush1.bf16.msra.mxu0 %v2293
        %2353 = vmatprep.subr.bf16.mxu0 0
        %2354 = vmatpush1.bf16.msra.mxu0 %v2294
        %2355 = vmatprep.subr.bf16.mxu0 0
        %2356 = vmatpush1.bf16.msra.mxu0 %v2295
        %2357 = vmatprep.subr.bf16.mxu0 0
        %2358 = vmatpush1.bf16.msra.mxu0 %v2296
        %2359 = vmatprep.subr.bf16.mxu0 0
        %2360 = vmatpush1.bf16.msra.mxu0 %v2297
        %2361 = vmatprep.subr.bf16.mxu0 0
        %2362 = vmatpush1.bf16.msra.mxu0 %v2298
        %2363 = vmatprep.mubr.bf16.mxu0 %v2092
        %2364 = vmatmul.mubr.bf16.gmra.mrb[0].mxu0 %v2091
        %v2365 = vpop.f32.mrb[0].mxu0
        %v2366 = vadd.f32 0.0, %v2365
        %v2367 = vpop.f32.mrb[0].mxu0
        %v2368 = vpop.f32.mrb[0].mxu0
        %v2369 = vadd.f32 0.0, %v2368
        %v2370 = vpop.f32.mrb[0].mxu0
        %2371 = vmatprep.mubr.bf16.mxu0 %v2095
        %2372 = vmatmul.mubr.bf16.gmra.mrb[0].mxu0 %v2094
        %v2373 = vpop.f32.mrb[0].mxu0
        %v2374 = vadd.f32 0.0, %v2373
        %v2375 = vpop.f32.mrb[0].mxu0
        %v2376 = vpop.f32.mrb[0].mxu0
        %v2377 = vadd.f32 0.0, %v2376
        %v2378 = vpop.f32.mrb[0].mxu0
        %2379 = vmatprep.mubr.bf16.mxu0 %v2098
        %2380 = vmatmul.mubr.bf16.gmra.mrb[0].mxu0 %v2097
        %v2381 = vpop.f32.mrb[0].mxu0
        %v2382 = vadd.f32 0.0, %v2381
        %v2383 = vpop.f32.mrb[0].mxu0
        %v2384 = vpop.f32.mrb[0].mxu0
        %v2385 = vadd.f32 0.0, %v2384
        %v2386 = vpop.f32.mrb[0].mxu0
        %2387 = vmatprep.mubr.bf16.mxu0 %v2101
        %2388 = vmatmul.mubr.bf16.gmra.mrb[0].mxu0 %v2100
        %v2389 = vpop.f32.mrb[0].mxu0
        %v2390 = vadd.f32 0.0, %v2389
        %v2391 = vpop.f32.mrb[0].mxu0
        %v2392 = vpop.f32.mrb[0].mxu0
        %v2393 = vadd.f32 0.0, %v2392
        %v2394 = vpop.f32.mrb[0].mxu0
        %2395 = vmatprep.mubr.bf16.mxu0 %v2104
        %2396 = vmatmul.mubr.bf16.gmra.mrb[0].mxu0 %v2103
        %v2397 = vpop.f32.mrb[0].mxu0
        %v2398 = vadd.f32 0.0, %v2397
        %v2399 = vpop.f32.mrb[0].mxu0
        %v2400 = vpop.f32.mrb[0].mxu0
        %v2401 = vadd.f32 0.0, %v2400
        %v2402 = vpop.f32.mrb[0].mxu0
        %2403 = vmatprep.mubr.bf16.mxu0 %v2107
        %2404 = vmatmul.mubr.bf16.gmra.mrb[0].mxu0 %v2106
        %v2405 = vpop.f32.mrb[0].mxu0
        %v2406 = vadd.f32 0.0, %v2405
        %v2407 = vpop.f32.mrb[0].mxu0
        %v2408 = vpop.f32.mrb[0].mxu0
        %v2409 = vadd.f32 0.0, %v2408
        %v2410 = vpop.f32.mrb[0].mxu0
        %2411 = vmatprep.mubr.bf16.mxu0 %v2110
        %2412 = vmatmul.mubr.bf16.gmra.mrb[0].mxu0 %v2109
        %v2413 = vpop.f32.mrb[0].mxu0
        %v2414 = vadd.f32 0.0, %v2413
        %v2415 = vpop.f32.mrb[0].mxu0
        %v2416 = vpop.f32.mrb[0].mxu0
        %v2417 = vadd.f32 0.0, %v2416
        %v2418 = vpop.f32.mrb[0].mxu0
        %2419 = vmatprep.mubr.bf16.mxu0 %v2113
        %2420 = vmatmul.mubr.bf16.gmra.mrb[0].mxu0 %v2112
        %v2421 = vpop.f32.mrb[0].mxu0
        %v2422 = vadd.f32 0.0, %v2421
        %v2423 = vpop.f32.mrb[0].mxu0
        %v2424 = vpop.f32.mrb[0].mxu0
        %v2425 = vadd.f32 0.0, %v2424
        %v2426 = vpop.f32.mrb[0].mxu0
        %2427 = vmatprep.mubr.bf16.mxu0 %v2116
        %2428 = vmatmul.mubr.bf16.gmra.mrb[0].mxu0 %v2115
        %v2429 = vpop.f32.mrb[0].mxu0
        %v2430 = vadd.f32 0.0, %v2429
        %v2431 = vpop.f32.mrb[0].mxu0
        %v2432 = vpop.f32.mrb[0].mxu0
        %v2433 = vadd.f32 0.0, %v2432
        %v2434 = vpop.f32.mrb[0].mxu0
        %2435 = vmatprep.mubr.bf16.mxu0 %v2119
        %2436 = vmatmul.mubr.bf16.gmra.mrb[0].mxu0 %v2118
        %v2437 = vpop.f32.mrb[0].mxu0
        %v2438 = vadd.f32 0.0, %v2437
        %v2439 = vpop.f32.mrb[0].mxu0
        %v2440 = vpop.f32.mrb[0].mxu0
        %v2441 = vadd.f32 0.0, %v2440
        %v2442 = vpop.f32.mrb[0].mxu0
        %2443 = vmatprep.mubr.bf16.mxu0 %v2122
        %2444 = vmatmul.mubr.bf16.gmra.mrb[0].mxu0 %v2121
        %v2445 = vpop.f32.mrb[0].mxu0
        %v2446 = vadd.f32 0.0, %v2445
        %v2447 = vpop.f32.mrb[0].mxu0
        %v2448 = vpop.f32.mrb[0].mxu0
        %v2449 = vadd.f32 0.0, %v2448
        %v2450 = vpop.f32.mrb[0].mxu0
        %2451 = vmatprep.mubr.bf16.mxu0 %v2125
        %2452 = vmatmul.mubr.bf16.gmra.mrb[0].mxu0 %v2124
        %v2453 = vpop.f32.mrb[0].mxu0
        %v2454 = vadd.f32 0.0, %v2453
        %v2455 = vpop.f32.mrb[0].mxu0
        %v2456 = vpop.f32.mrb[0].mxu0
        %v2457 = vadd.f32 0.0, %v2456
        %v2458 = vpop.f32.mrb[0].mxu0
        %2459 = vmatprep.mubr.bf16.mxu0 %v2128
        %2460 = vmatmul.mubr.bf16.gmra.mrb[0].mxu0 %v2127
        %v2461 = vpop.f32.mrb[0].mxu0
        %v2462 = vadd.f32 0.0, %v2461
        %v2463 = vpop.f32.mrb[0].mxu0
        %v2464 = vpop.f32.mrb[0].mxu0
        %v2465 = vadd.f32 0.0, %v2464
        %v2466 = vpop.f32.mrb[0].mxu0
        %2467 = vmatprep.mubr.bf16.mxu0 %v2131
        %2468 = vmatmul.mubr.bf16.gmra.mrb[0].mxu0 %v2130
        %v2469 = vpop.f32.mrb[0].mxu0
        %v2470 = vadd.f32 0.0, %v2469
        %v2471 = vpop.f32.mrb[0].mxu0
        %v2472 = vpop.f32.mrb[0].mxu0
        %v2473 = vadd.f32 0.0, %v2472
        %v2474 = vpop.f32.mrb[0].mxu0
        %2475 = vmatprep.mubr.bf16.mxu0 %v2134
        %2476 = vmatmul.mubr.bf16.gmra.mrb[0].mxu0 %v2133
        %v2477 = vpop.f32.mrb[0].mxu0
        %v2478 = vadd.f32 0.0, %v2477
        %v2479 = vpop.f32.mrb[0].mxu0
        %v2480 = vpop.f32.mrb[0].mxu0
        %v2481 = vadd.f32 0.0, %v2480
        %v2482 = vpop.f32.mrb[0].mxu0
        %2483 = vmatprep.mubr.bf16.mxu0 %v2137
        %2484 = vmatmul.mubr.bf16.gmra.mrb[0].mxu0 %v2136
        %v2485 = vpop.f32.mrb[0].mxu0
        %v2486 = vadd.f32 0.0, %v2485
        %v2487 = vpop.f32.mrb[0].mxu0
        %v2488 = vpop.f32.mrb[0].mxu0
        %v2489 = vadd.f32 0.0, %v2488
        %v2490 = vpop.f32.mrb[0].mxu0
        %2491 = vdwg.mxu0
        %2492 = vmatprep.subr.bf16.mxu0 0
        %2493 = vmatpush1.bf16.msra.mxu0 %v2299
        %2494 = vmatprep.subr.bf16.mxu0 0
        %2495 = vmatpush1.bf16.msra.mxu0 %v2300
        %2496 = vmatprep.subr.bf16.mxu0 0
        %2497 = vmatpush1.bf16.msra.mxu0 %v2301
        %2498 = vmatprep.subr.bf16.mxu0 0
        %2499 = vmatpush1.bf16.msra.mxu0 %v2302
        %2500 = vmatprep.subr.bf16.mxu0 0
        %2501 = vmatpush1.bf16.msra.mxu0 %v2303
        %2502 = vmatprep.subr.bf16.mxu0 0
        %2503 = vmatpush1.bf16.msra.mxu0 %v2304
        %2504 = vmatprep.subr.bf16.mxu0 0
        %2505 = vmatpush1.bf16.msra.mxu0 %v2305
        %2506 = vmatprep.subr.bf16.mxu0 0
        %2507 = vmatpush1.bf16.msra.mxu0 %v2306
        %2508 = vmatprep.subr.bf16.mxu0 0
        %2509 = vmatpush1.bf16.msra.mxu0 0
        %2510 = vmatprep.subr.bf16.mxu0 0
        %2511 = vmatpush1.bf16.msra.mxu0 0
        %2512 = vmatprep.subr.bf16.mxu0 0
        %2513 = vmatpush1.bf16.msra.mxu0 0
        %2514 = vmatprep.subr.bf16.mxu0 0
        %2515 = vmatpush1.bf16.msra.mxu0 0
        %2516 = vmatprep.subr.bf16.mxu0 0
        %2517 = vmatpush1.bf16.msra.mxu0 0
        %2518 = vmatprep.subr.bf16.mxu0 0
        %2519 = vmatpush1.bf16.msra.mxu0 0
        %2520 = vmatprep.subr.bf16.mxu0 0
        %2521 = vmatpush1.bf16.msra.mxu0 0
        %2522 = vmatprep.subr.bf16.mxu0 0
        %2523 = vmatpush1.bf16.msra.mxu0 0
        %2524 = vmatprep.mubr.bf16.mxu0 0
        %2525 = vmatmul.mubr.bf16.gmra.mrb[0].mxu0 %v2093
        %v2526 = vpop.f32.mrb[0].mxu0
        %v2527 = vadd.f32 %v2366, %v2526
        %v2528 = vpop.f32.mrb[0].mxu0
        %v2529 = vpop.f32.mrb[0].mxu0
        %v2530 = vadd.f32 %v2369, %v2529
        %v2531 = vpop.f32.mrb[0].mxu0
        %2532 = vmatprep.mubr.bf16.mxu0 0
        %2533 = vmatmul.mubr.bf16.gmra.mrb[0].mxu0 %v2096
        %v2534 = vpop.f32.mrb[0].mxu0
        %v2535 = vadd.f32 %v2374, %v2534
        %v2536 = vpop.f32.mrb[0].mxu0
        %v2537 = vpop.f32.mrb[0].mxu0
        %v2538 = vadd.f32 %v2377, %v2537
        %v2539 = vpop.f32.mrb[0].mxu0
        %2540 = vmatprep.mubr.bf16.mxu0 0
        %2541 = vmatmul.mubr.bf16.gmra.mrb[0].mxu0 %v2099
        %v2542 = vpop.f32.mrb[0].mxu0
        %v2543 = vadd.f32 %v2382, %v2542
        %v2544 = vpop.f32.mrb[0].mxu0
        %v2545 = vpop.f32.mrb[0].mxu0
        %v2546 = vadd.f32 %v2385, %v2545
        %v2547 = vpop.f32.mrb[0].mxu0
        %2548 = vmatprep.mubr.bf16.mxu0 0
        %2549 = vmatmul.mubr.bf16.gmra.mrb[0].mxu0 %v2102
        %v2550 = vpop.f32.mrb[0].mxu0
        %v2551 = vadd.f32 %v2390, %v2550
        %v2552 = vpop.f32.mrb[0].mxu0
        %v2553 = vpop.f32.mrb[0].mxu0
        %v2554 = vadd.f32 %v2393, %v2553
        %v2555 = vpop.f32.mrb[0].mxu0
        %2556 = vmatprep.mubr.bf16.mxu0 0
        %2557 = vmatmul.mubr.bf16.gmra.mrb[0].mxu0 %v2105
        %v2558 = vpop.f32.mrb[0].mxu0
        %v2559 = vadd.f32 %v2398, %v2558
        %v2560 = vpop.f32.mrb[0].mxu0
        %v2561 = vpop.f32.mrb[0].mxu0
        %v2562 = vadd.f32 %v2401, %v2561
        %v2563 = vpop.f32.mrb[0].mxu0
        %2564 = vmatprep.mubr.bf16.mxu0 0
        %2565 = vmatmul.mubr.bf16.gmra.mrb[0].mxu0 %v2108
        %v2566 = vpop.f32.mrb[0].mxu0
        %v2567 = vadd.f32 %v2406, %v2566
        %v2568 = vpop.f32.mrb[0].mxu0
        %v2569 = vpop.f32.mrb[0].mxu0
        %v2570 = vadd.f32 %v2409, %v2569
        %v2571 = vpop.f32.mrb[0].mxu0
        %2572 = vmatprep.mubr.bf16.mxu0 0
        %2573 = vmatmul.mubr.bf16.gmra.mrb[0].mxu0 %v2111
        %v2574 = vpop.f32.mrb[0].mxu0
        %v2575 = vadd.f32 %v2414, %v2574
        %v2576 = vpop.f32.mrb[0].mxu0
        %v2577 = vpop.f32.mrb[0].mxu0
        %v2578 = vadd.f32 %v2417, %v2577
        %v2579 = vpop.f32.mrb[0].mxu0
        %2580 = vmatprep.mubr.bf16.mxu0 0
        %2581 = vmatmul.mubr.bf16.gmra.mrb[0].mxu0 %v2114
        %v2582 = vpop.f32.mrb[0].mxu0
        %v2583 = vadd.f32 %v2422, %v2582
        %v2584 = vpop.f32.mrb[0].mxu0
        %v2585 = vpop.f32.mrb[0].mxu0
        %v2586 = vadd.f32 %v2425, %v2585
        %v2587 = vpop.f32.mrb[0].mxu0
        %2588 = vmatprep.mubr.bf16.mxu0 0
        %2589 = vmatmul.mubr.bf16.gmra.mrb[0].mxu0 %v2117
        %v2590 = vpop.f32.mrb[0].mxu0
        %v2591 = vadd.f32 %v2430, %v2590
        %v2592 = vpop.f32.mrb[0].mxu0
        %v2593 = vpop.f32.mrb[0].mxu0
        %v2594 = vadd.f32 %v2433, %v2593
        %v2595 = vpop.f32.mrb[0].mxu0
        %2596 = vmatprep.mubr.bf16.mxu0 0
        %2597 = vmatmul.mubr.bf16.gmra.mrb[0].mxu0 %v2120
        %v2598 = vpop.f32.mrb[0].mxu0
        %v2599 = vadd.f32 %v2438, %v2598
        %v2600 = vpop.f32.mrb[0].mxu0
        %v2601 = vpop.f32.mrb[0].mxu0
        %v2602 = vadd.f32 %v2441, %v2601
        %v2603 = vpop.f32.mrb[0].mxu0
        %2604 = vmatprep.mubr.bf16.mxu0 0
        %2605 = vmatmul.mubr.bf16.gmra.mrb[0].mxu0 %v2123
        %v2606 = vpop.f32.mrb[0].mxu0
        %v2607 = vadd.f32 %v2446, %v2606
        %v2608 = vpop.f32.mrb[0].mxu0
        %v2609 = vpop.f32.mrb[0].mxu0
        %v2610 = vadd.f32 %v2449, %v2609
        %v2611 = vpop.f32.mrb[0].mxu0
        %2612 = vmatprep.mubr.bf16.mxu0 0
        %2613 = vmatmul.mubr.bf16.gmra.mrb[0].mxu0 %v2126
        %v2614 = vpop.f32.mrb[0].mxu0
        %v2615 = vadd.f32 %v2454, %v2614
        %v2616 = vpop.f32.mrb[0].mxu0
        %v2617 = vpop.f32.mrb[0].mxu0
        %v2618 = vadd.f32 %v2457, %v2617
        %v2619 = vpop.f32.mrb[0].mxu0
        %2620 = vmatprep.mubr.bf16.mxu0 0
        %2621 = vmatmul.mubr.bf16.gmra.mrb[0].mxu0 %v2129
        %v2622 = vpop.f32.mrb[0].mxu0
        %v2623 = vadd.f32 %v2462, %v2622
        %v2624 = vpop.f32.mrb[0].mxu0
        %v2625 = vpop.f32.mrb[0].mxu0
        %v2626 = vadd.f32 %v2465, %v2625
        %v2627 = vpop.f32.mrb[0].mxu0
        %2628 = vmatprep.mubr.bf16.mxu0 0
        %2629 = vmatmul.mubr.bf16.gmra.mrb[0].mxu0 %v2132
        %v2630 = vpop.f32.mrb[0].mxu0
        %v2631 = vadd.f32 %v2470, %v2630
        %v2632 = vpop.f32.mrb[0].mxu0
        %v2633 = vpop.f32.mrb[0].mxu0
        %v2634 = vadd.f32 %v2473, %v2633
        %v2635 = vpop.f32.mrb[0].mxu0
        %2636 = vmatprep.mubr.bf16.mxu0 0
        %2637 = vmatmul.mubr.bf16.gmra.mrb[0].mxu0 %v2135
        %v2638 = vpop.f32.mrb[0].mxu0
        %v2639 = vadd.f32 %v2478, %v2638
        %v2640 = vpop.f32.mrb[0].mxu0
        %v2641 = vpop.f32.mrb[0].mxu0
        %v2642 = vadd.f32 %v2481, %v2641
        %v2643 = vpop.f32.mrb[0].mxu0
        %2644 = vmatprep.mubr.bf16.mxu0 0
        %2645 = vmatmul.mubr.bf16.gmra.mrb[0].mxu0 %v2138
        %v2646 = vpop.f32.mrb[0].mxu0
        %v2647 = vadd.f32 %v2486, %v2646
        %v2648 = vpop.f32.mrb[0].mxu0
        %v2649 = vpop.f32.mrb[0].mxu0
        %v2650 = vadd.f32 %v2489, %v2649
        %v2651 = vpop.f32.mrb[0].mxu0
        %2652 = vdwg.mxu0
        %2653 = vst [vmem:[%s259] sm:$0xff] %v2527
        %2654 = vst [vmem:[%s259 + $0x8] sm:$0xff] %v2530
        %2655 = vst [vmem:[%s259 + $0x10] sm:$0xff] %v2535
        %2656 = vst [vmem:[%s259 + $0x18] sm:$0xff] %v2538
        %2657 = vst [vmem:[%s259 + $0x20] sm:$0xff] %v2543
        %2658 = vst [vmem:[%s259 + $0x28] sm:$0xff] %v2546
        %2659 = vst [vmem:[%s259 + $0x30] sm:$0xff] %v2551
        %2660 = vst [vmem:[%s259 + $0x38] sm:$0xff] %v2554
        %2661 = vst [vmem:[%s259 + $0x40] sm:$0xff] %v2559
        %2662 = vst [vmem:[%s259 + $0x48] sm:$0xff] %v2562
        %2663 = vst [vmem:[%s259 + $0x50] sm:$0xff] %v2567
        %2664 = vst [vmem:[%s259 + $0x58] sm:$0xff] %v2570
        %2665 = vst [vmem:[%s259 + $0x60] sm:$0xff] %v2575
        %2666 = vst [vmem:[%s259 + $0x68] sm:$0xff] %v2578
        %2667 = vst [vmem:[%s259 + $0x70] sm:$0xff] %v2583
        %2668 = vst [vmem:[%s259 + $0x78] sm:$0xff] %v2586
        %2669 = vst [vmem:[%s259 + $0x80] sm:$0xff] %v2591
        %2670 = vst [vmem:[%s259 + $0x88] sm:$0xff] %v2594
        %2671 = vst [vmem:[%s259 + $0x90] sm:$0xff] %v2599
        %2672 = vst [vmem:[%s259 + $0x98] sm:$0xff] %v2602
        %2673 = vst [vmem:[%s259 + $0xa0] sm:$0xff] %v2607
        %2674 = vst [vmem:[%s259 + $0xa8] sm:$0xff] %v2610
        %2675 = vst [vmem:[%s259 + $0xb0] sm:$0xff] %v2615
        %2676 = vst [vmem:[%s259 + $0xb8] sm:$0xff] %v2618
        %2677 = vst [vmem:[%s259 + $0xc0] sm:$0xff] %v2623
        %2678 = vst [vmem:[%s259 + $0xc8] sm:$0xff] %v2626
        %2679 = vst [vmem:[%s259 + $0xd0] sm:$0xff] %v2631
        %2680 = vst [vmem:[%s259 + $0xd8] sm:$0xff] %v2634
        %2681 = vst [vmem:[%s259 + $0xe0] sm:$0xff] %v2639
        %2682 = vst [vmem:[%s259 + $0xe8] sm:$0xff] %v2642
        %2683 = vst [vmem:[%s259 + $0xf0] sm:$0xff] %v2647
        %2684 = vst [vmem:[%s259 + $0xf8] sm:$0xff] %v2650
        %s2685 = sand.u32 %s120, 1
        %s2686 = scalar_lea.sflag [#allocation4], %s2685
        %s2687 = sand.u32 %s120, 1
        %s2688 = smul.addr %s2687, 256
        %s2689 = scalar_lea.vmem [#allocation10], %s2688
        // Predicated region
        $region53: #{tpu_custom_call.1} parent=35 // pred_check
          %p2690 = pneg %p130
        $region54: #{tpu_custom_call.1} parent=35 // pred_check_branch
          %2692 = sbr.rel (%p2690) target = $region56
        $region55: #{tpu_custom_call.1} parent=35 // pred_region
          %s2693 = smul.u32 32, %s23
          %s2695 = ssub.s32 4096, 4096
          %2696 = vsyncadd %s2686, %s2695
          %s2697 = smul.addr %s2693, 128
          %s2698 = scalar_lea.hbm %s4, %s2697
          %s2699 = sshll.u32 %s2689, 4
          %s2700 = int_to_ptr.vmem [resolvable:$true] %s2699
          %2705 = dma.vmem_to_hbm [thread:$0]  %s2700, 4096, %s2698, %s2686, 128, 128, 8
        $region56: #{tpu_custom_call.1} parent=35 // pred_fallthru
          _
      $region36: #{tpu_custom_call.1} parent=5 // pred_fallthru
        _
      %p2706 = scmp.le.s32.totalorder 2, %s18
      // Predicated region
      $region57: #{tpu_custom_call.1} parent=5 // pred_check
        %p2707 = pneg %p2706
      $region58: #{tpu_custom_call.1} parent=5 // pred_check_branch
        %2709 = sbr.rel (%p2707) target = $region60
      $region59: #{tpu_custom_call.1} parent=5 // pred_region
        %s2710 = ssub.s32 %s18, 2
        // Predicated region
        $region61: #{tpu_custom_call.1} parent=59 // pred_check
          %p2711 = pneg %p136
        $region62: #{tpu_custom_call.1} parent=59 // pred_check_branch
          %2713 = sbr.rel (%p2711) target = $region64
        $region63: #{tpu_custom_call.1} parent=59 // pred_region
          %s2714 = sand.u32 %s121, 1
          %s2715 = scalar_lea.sflag [#allocation4], %s2714
          %s2716 = sand.u32 %s121, 1
          %s2717 = smul.addr %s2716, 256
          %s2718 = scalar_lea.vmem [#allocation10], %s2717
          %2719 = dma.done %s2715, 4096
        $region64: #{tpu_custom_call.1} parent=59 // pred_fallthru
          _
      $region60: #{tpu_custom_call.1} parent=5 // pred_fallthru
        _
    $region6: #{tpu_custom_call.1} parent=1 // loop_footer
      %s22 = sadd.s32 1, %s18
    $region7: #{tpu_custom_call.1} parent=1 // loop_footer_branch
      %17 = sbr.rel target = $region3
    $region8: #{tpu_custom_call.1} parent=1 // loop_exit
      _
    %2720 = vsyncpa [#allocation3], 1
    %s2721 = scalar_lea.sflag [#allocation3], 1
    %2722 = vsyncpa %s2721, 1
    %2723 = vsyncpa [#allocation6], 1
    %2724 = vsyncpa [#allocation9], 1
    %2725 = vsyncpa [#allocation4], 1
    %s2726 = scalar_lea.sflag [#allocation4], 1
    %2727 = vsyncpa %s2726, 1

</llo_original>
